<compile_context>
chip_gen: v7x
topology: tpu7x:2x2x1
jax: 0.10.0
libtpu: 0.0.40
codegen_flags: <defaults>
</compile_context>

<pallas_src>
import functools
import math

import jax
import jax.numpy as jnp
from jax.experimental import pallas as pl
from jax.experimental.pallas import tpu as pltpu


def _round_up(x, m):
    return ((x + m - 1) // m) * m


def _msa2_kernel(x_ref, y_ref,
                 wq_ref, bq_ref,
                 wk_ref, bk_ref,
                 wv_ref, bv_ref,
                 wo_ref, bo_ref,
                 hsum_ref, hbcast_ref,
                 o_ref,
                 *, nhead, head_dim, seq_len, approx_recip):
    TB = x_ref.shape[0]          # batch tile
    L = seq_len
    D = nhead * head_dim

    x = x_ref[...]               # (TB, nhid)
    y = y_ref[...]               # (TB*L, nhid)   -- (batch, seq) flattened, token-major

    # --- Projections: one MXU matmul each over the whole batch tile. ---
    # 1/sqrt(head_dim) is already folded into WQ / bq by the wrapper.
    q = jnp.dot(x, wq_ref[...], preferred_element_type=jnp.float32) + bq_ref[...]   # (TB, D)
    k = jnp.dot(y, wk_ref[...], preferred_element_type=jnp.float32) + bk_ref[...]   # (TB*L, D)
    v = jnp.dot(y, wv_ref[...], preferred_element_type=jnp.float32) + bv_ref[...]   # (TB*L, D)

    k3 = k.reshape(TB, L, D)     # leading-dim split only (free)
    v3 = v.reshape(TB, L, D)

    # --- Attention: all heads in one lane-dense pass (no per-head loop). ---
    # Scores: full-D VPU multiply, then the per-head lane-group sum is done on
    # the MXU with a 0/1 head-sum matrix (avoids lane-splitting reshapes and
    # nhead separate XLU reductions).
    kq = k3 * q[:, None, :]                                                # (TB, L, D)
    s = jnp.dot(kq.reshape(TB * L, D), hsum_ref[...],
                preferred_element_type=jnp.float32)                        # (TB*L, nhead)
    s3 = s.reshape(TB, L, nhead)

    # Softmax over L, once for all heads (sublane reduce; exp on EUP).
    s3 = s3 - jnp.max(s3, axis=1, keepdims=True)
    e = jnp.exp(s3)
    denom = jnp.sum(e, axis=1, keepdims=True)                              # (TB, 1, nhead)
    if approx_recip:
        p = e * pl.reciprocal(denom, approx=True)
    else:
        p = e / denom                                                      # exact (default)
    # TODO(synk): mask (masked_fill -inf) not implemented; dropout = identity.

    # Expand per-head probabilities back to full D (MXU, tiny K), then one
    # lane-dense weighted sum over L.  att never leaves registers (no scratch).
    p_full = jnp.dot(p.reshape(TB * L, nhead), hbcast_ref[...],
                     preferred_element_type=jnp.float32).reshape(TB, L, D)
    att = jnp.sum(p_full * v3, axis=1)                                     # (TB, D)

    # Output projection: cast att to the weight dtype so a bf16 compute path
    # runs the MXU at full bf16 rate (no-op cast for f32).
    out = jnp.dot(att.astype(wo_ref.dtype), wo_ref[...],
                  preferred_element_type=jnp.float32) + bo_ref[...]
    o_ref[...] = out.astype(o_ref.dtype)                                   # (TB, nhid)


def _vmem_capacity_bytes():
    try:
        return int(pltpu.get_tpu_info().vmem_capacity_bytes)
    except Exception:
        return 64 * 1024 * 1024        # conservative fallback (v7x per-TC VMEM)


def _pick_batch_tile(B, nhid, L, D, nhead, block_b, bytes_in, vmem_budget):
    """Largest multiple-of-8 batch tile that fits the VMEM budget."""
    # Grid-invariant operands (single-buffered): projections + biases + 0/1 head matrices.
    weight_bytes = 4 * nhid * D * bytes_in + (3 * D + nhid) * 4 + 2 * D * nhead * 4
    # Per-batch-element footprint: pipelined I/O tiles + f32 in-kernel temporaries.
    per_batch = (2 * nhid * bytes_in          # x (double-buffered)
                 + 2 * L * nhid * bytes_in    # y (double-buffered)
                 + 2 * nhid * 4               # out (double-buffered)
                 + 4 * L * D * 4              # k, v, kq, p_full (f32)
                 + 4 * D * 4)                 # q, att, misc
    avail = max(vmem_budget - weight_bytes, 8 * per_batch)
    tb_cap = max(8, (avail // per_batch) // 8 * 8)
    tb = _round_up(max(1, min(block_b, B)), 8)
    tb = min(tb, tb_cap)
    if B > 8:                                  # keep >= 2 grid steps (v7x: 2 TensorCores)
        tb = min(tb, _round_up((B + 1) // 2, 8))
    return max(tb, 8)


def _const_spec(rows, cols):
    """Grid-invariant operand: single-buffered if pipeline_mode is supported."""
    idx = lambda i: (0, 0)
    try:
        return pl.BlockSpec((rows, cols), idx, pipeline_mode=pl.Buffered(1))
    except TypeError:                          # older BlockSpec without pipeline_mode
        return pl.BlockSpec((rows, cols), idx)


def msa2_forward(x_nchw, y_nchw, params, *, nhead, head_dim,
                 block_b=128, compute_dtype=jnp.float32, approx_recip=False):
    """x_nchw: (B, nhid, 1, 1), y_nchw: (B, nhid, L, 1) -> (B, nhid, 1, 1)."""
    wq, bq, wk, bk, wv, bv, wo, bo = params
    B, nhid = x_nchw.shape[0], x_nchw.shape[1]
    L = y_nchw.shape[2]
    D = nhead * head_dim
    bytes_in = jnp.dtype(compute_dtype).itemsize

    # VMEM-derived tiling (v5e: raise the 16 MiB default scoped limit; v7x: only
    # 64 MiB physical per TensorCore) with headroom left for the compiler.
    vmem_cap = _vmem_capacity_bytes()
    vmem_limit = max(32 << 20, min(int(vmem_cap * 0.9), vmem_cap - (4 << 20)))
    vmem_budget = int(vmem_limit * 0.8)
    TB = _pick_batch_tile(B, nhid, L, D, nhead, block_b, bytes_in, vmem_budget)
    B_pad = _round_up(B, TB)
    n_tiles = B_pad // TB

    # Host-side layout prep.  x and the output need only pure reshapes; y gets
    # one channels-last transpose so the kernel can run a single token-major
    # (TB*L, nhid)@(nhid, D) projection per tile.
    x2 = x_nchw.reshape(B, nhid)                                   # free reshape
    y3 = y_nchw.reshape(B, nhid, L).transpose(0, 2, 1)             # (B, L, nhid)
    if B_pad != B:
        x2 = jnp.pad(x2, ((0, B_pad - B), (0, 0)))
        y3 = jnp.pad(y3, ((0, B_pad - B), (0, 0), (0, 0)))
    y_flat = y3.reshape(B_pad * L, nhid)                           # free reshape

    # Weight prep: conv (out, in) -> (in, out); fold 1/sqrt(head_dim) into WQ/bq.
    inv_sqrt = 1.0 / math.sqrt(head_dim)
    wq_t = (wq.T * inv_sqrt).astype(compute_dtype)                 # (nhid, D)
    wk_t = wk.T.astype(compute_dtype)                              # (nhid, D)
    wv_t = wv.T.astype(compute_dtype)                              # (nhid, D)
    wo_t = wo.T.astype(compute_dtype)                              # (D, nhid)
    bq2 = (bq * inv_sqrt).reshape(1, D).astype(jnp.float32)
    bk2 = bk.reshape(1, D).astype(jnp.float32)
    bv2 = bv.reshape(1, D).astype(jnp.float32)
    bo2 = bo.reshape(1, nhid).astype(jnp.float32)

    # 0/1 head-group matrices: hsum[d, h] = 1 iff d belongs to head h.
    hsum = jnp.repeat(jnp.eye(nhead, dtype=jnp.float32), head_dim, axis=0)   # (D, nhead)
    hbcast = hsum.T                                                          # (nhead, D)

    x2 = x2.astype(compute_dtype)
    y_flat = y_flat.astype(compute_dtype)

    kernel = functools.partial(_msa2_kernel, nhead=nhead, head_dim=head_dim,
                               seq_len=L, approx_recip=approx_recip)

    out = pl.pallas_call(
        kernel,
        out_shape=jax.ShapeDtypeStruct((B_pad, nhid), jnp.float32),
        grid_spec=pltpu.PrefetchScalarGridSpec(
            num_scalar_prefetch=0,
            grid=(n_tiles,),
            in_specs=[
                pl.BlockSpec((TB, nhid), lambda i: (i, 0)),        # x tile
                pl.BlockSpec((TB * L, nhid), lambda i: (i, 0)),    # y tile (b,l flattened)
                _const_spec(nhid, D), _const_spec(1, D),           # WQ (scaled), bq (scaled)
                _const_spec(nhid, D), _const_spec(1, D),           # WK, bk
                _const_spec(nhid, D), _const_spec(1, D),           # WV, bv
                _const_spec(D, nhid), _const_spec(1, nhid),        # WO, bo
                _const_spec(D, nhead), _const_spec(nhead, D),      # head sum / broadcast 0/1
            ],
            out_specs=pl.BlockSpec((TB, nhid), lambda i: (i, 0)),
        ),
        compiler_params=pltpu.CompilerParams(
            dimension_semantics=("parallel",),                     # batch tiles across cores
            vmem_limit_bytes=vmem_limit),
    )(x2, y_flat, wq_t, bq2, wk_t, bk2, wv_t, bv2, wo_t, bo2, hsum, hbcast)

    if B_pad != B:
        out = out[:B]
    return out.reshape(B, nhid, 1, 1)                              # free reshape (no transpose)


def msa2_reference(x_nchw, y_nchw, params, *, nhead, head_dim):
    """Plain-JAX reference mirroring the PyTorch forward (eval mode, no mask)."""
    wq, bq, wk, bk, wv, bv, wo, bo = params
    B, nhid = x_nchw.shape[0], x_nchw.shape[1]
    L = y_nchw.shape[2]
    D = nhead * head_dim

    with jax.default_matmul_precision("highest"):
        xc = x_nchw.reshape(B, nhid)                                  # (B, nhid)
        yc = y_nchw.reshape(B, nhid, L)                               # (B, nhid, L)

        q = xc @ wq.T + bq                                            # (B, D)
        k = jnp.einsum('bnl,dn->bdl', yc, wk) + bk[None, :, None]     # (B, D, L)
        v = jnp.einsum('bnl,dn->bdl', yc, wv) + bv[None, :, None]     # (B, D, L)

        qh = q.reshape(B, nhead, 1, head_dim)
        kh = k.reshape(B, nhead, head_dim, L)
        vh = v.reshape(B, nhead, head_dim, L).transpose(0, 1, 3, 2)   # (B, h, L, hd)

        pre_a = jnp.matmul(qh, kh) / math.sqrt(head_dim)              # (B, h, 1, L)
        alphas = jax.nn.softmax(pre_a, axis=3)
        att = jnp.matmul(alphas, vh).reshape(B, D)                    # (B, D)
        ret = att @ wo.T + bo                                         # (B, nhid)
    return ret.reshape(B, nhid, 1, 1)


if __name__ == "__main__":
    # Small, lane-friendly shapes consistent with the module's forward.
    B, nhid, L = 16, 128, 8
    nhead, head_dim = 4, 32
    D = nhead * head_dim

    key = jax.random.PRNGKey(0)
    ks = jax.random.split(key, 10)
    scale = 0.1
    params = (
        scale * jax.random.normal(ks[0], (D, nhid), jnp.float32),   # WQ weight (out, in)
        scale * jax.random.normal(ks[1], (D,), jnp.float32),        # WQ bias
        scale * jax.random.normal(ks[2], (D, nhid), jnp.float32),   # WK weight
        scale * jax.random.normal(ks[3], (D,), jnp.float32),        # WK bias
        scale * jax.random.normal(ks[4], (D, nhid), jnp.float32),   # WV weight
        scale * jax.random.normal(ks[5], (D,), jnp.float32),        # WV bias
        scale * jax.random.normal(ks[6], (nhid, D), jnp.float32),   # WO weight
        scale * jax.random.normal(ks[7], (nhid,), jnp.float32),     # WO bias
    )

    x = jax.random.normal(ks[8], (B, nhid, 1, 1), jnp.float32)      # relay token (NCHW)
    y = jax.random.normal(ks[9], (B, nhid, L, 1), jnp.float32)      # sequence (NCHW)

    # block_b=8 so the demo exercises multiple batch-tile grid steps.
    out = msa2_forward(x, y, params, nhead=nhead, head_dim=head_dim, block_b=8)
    out = jax.block_until_ready(out)

    ref = msa2_reference(x, y, params, nhead=nhead, head_dim=head_dim)
    assert out.shape == (B, nhid, 1, 1)
    # Softmax now uses exact division and the reference runs at HIGHEST matmul
    # precision; the tolerance below is retained only as margin for MXU f32
    # pass-decomposition / reduction-order differences across TPU generations.
    assert jnp.allclose(out, ref, atol=1e-2, rtol=1e-2), "mismatch vs reference"

    print("KERNEL_OK")
</pallas_src>

<mosaic_0001>
module attributes {stable_mosaic.version = 11 : i64} {
  func.func @_msa2_kernel(%arg0: i32, %arg1: memref<8x128xf32, #tpu.memory_space<vmem>>, %arg2: memref<64x128xf32, #tpu.memory_space<vmem>>, %arg3: memref<128x128xf32, #tpu.memory_space<vmem>>, %arg4: memref<1x128xf32, #tpu.memory_space<vmem>>, %arg5: memref<128x128xf32, #tpu.memory_space<vmem>>, %arg6: memref<1x128xf32, #tpu.memory_space<vmem>>, %arg7: memref<128x128xf32, #tpu.memory_space<vmem>>, %arg8: memref<1x128xf32, #tpu.memory_space<vmem>>, %arg9: memref<128x128xf32, #tpu.memory_space<vmem>>, %arg10: memref<1x128xf32, #tpu.memory_space<vmem>>, %arg11: memref<128x4xf32, #tpu.memory_space<vmem>>, %arg12: memref<4x128xf32, #tpu.memory_space<vmem>>, %arg13: memref<8x128xf32, #tpu.memory_space<vmem>>) attributes {dimension_semantics = [#tpu.dimension_semantics<parallel>], iteration_bounds = array<i64: 2>, scalar_prefetch = 0 : i64, scratch_operands = 0 : i64, tpu.core_type = #tpu.core_type<tc>, window_params = [{transform_indices = @transform_0, window_bounds = array<i64: 8, 128>}, {transform_indices = @transform_1, window_bounds = array<i64: 64, 128>}, {pipeline_mode = #tpu.pipeline_mode<synchronous>, transform_indices = @transform_2, window_bounds = array<i64: 128, 128>}, {pipeline_mode = #tpu.pipeline_mode<synchronous>, transform_indices = @transform_3, window_bounds = array<i64: 1, 128>}, {pipeline_mode = #tpu.pipeline_mode<synchronous>, transform_indices = @transform_4, window_bounds = array<i64: 128, 128>}, {pipeline_mode = #tpu.pipeline_mode<synchronous>, transform_indices = @transform_5, window_bounds = array<i64: 1, 128>}, {pipeline_mode = #tpu.pipeline_mode<synchronous>, transform_indices = @transform_6, window_bounds = array<i64: 128, 128>}, {pipeline_mode = #tpu.pipeline_mode<synchronous>, transform_indices = @transform_7, window_bounds = array<i64: 1, 128>}, {pipeline_mode = #tpu.pipeline_mode<synchronous>, transform_indices = @transform_8, window_bounds = array<i64: 128, 128>}, {pipeline_mode = #tpu.pipeline_mode<synchronous>, transform_indices = @transform_9, window_bounds = array<i64: 1, 128>}, {pipeline_mode = #tpu.pipeline_mode<synchronous>, transform_indices = @transform_10, window_bounds = array<i64: 128, 4>}, {pipeline_mode = #tpu.pipeline_mode<synchronous>, transform_indices = @transform_11, window_bounds = array<i64: 4, 128>}, {transform_indices = @transform_12, window_bounds = array<i64: 8, 128>}]} {
    %c0 = arith.constant 0 : index
    %c0_0 = arith.constant 0 : index
    %0 = vector.load %arg1[%c0, %c0_0] : memref<8x128xf32, #tpu.memory_space<vmem>>, vector<8x128xf32>
    %c0_1 = arith.constant 0 : index
    %c0_2 = arith.constant 0 : index
    %1 = vector.load %arg2[%c0_1, %c0_2] : memref<64x128xf32, #tpu.memory_space<vmem>>, vector<64x128xf32>
    %c0_3 = arith.constant 0 : index
    %c0_4 = arith.constant 0 : index
    %2 = vector.load %arg3[%c0_3, %c0_4] : memref<128x128xf32, #tpu.memory_space<vmem>>, vector<128x128xf32>
    %cst = arith.constant dense<0.000000e+00> : vector<8x128xf32>
    %3 = tpu.matmul %0, %2, %cst {dimension_numbers = #tpu.dot_dimension_numbers<[1], [0], [0], [1], [0, 0, 1, 1], [], []>} : vector<8x128xf32>, vector<128x128xf32>, vector<8x128xf32> -> vector<8x128xf32>
    %c0_5 = arith.constant 0 : index
    %c0_6 = arith.constant 0 : index
    %4 = vector.load %arg4[%c0_5, %c0_6] : memref<1x128xf32, #tpu.memory_space<vmem>>, vector<1x128xf32>
    %5 = vector.broadcast %4 : vector<1x128xf32> to vector<8x128xf32>
    %6 = arith.addf %3, %5 : vector<8x128xf32>
    %c0_7 = arith.constant 0 : index
    %c0_8 = arith.constant 0 : index
    %7 = vector.load %arg5[%c0_7, %c0_8] : memref<128x128xf32, #tpu.memory_space<vmem>>, vector<128x128xf32>
    %cst_9 = arith.constant dense<0.000000e+00> : vector<64x128xf32>
    %8 = tpu.matmul %1, %7, %cst_9 {dimension_numbers = #tpu.dot_dimension_numbers<[1], [0], [0], [1], [0, 0, 1, 1], [], []>} : vector<64x128xf32>, vector<128x128xf32>, vector<64x128xf32> -> vector<64x128xf32>
    %c0_10 = arith.constant 0 : index
    %c0_11 = arith.constant 0 : index
    %9 = vector.load %arg6[%c0_10, %c0_11] : memref<1x128xf32, #tpu.memory_space<vmem>>, vector<1x128xf32>
    %10 = vector.broadcast %9 : vector<1x128xf32> to vector<64x128xf32>
    %11 = arith.addf %8, %10 : vector<64x128xf32>
    %c0_12 = arith.constant 0 : index
    %c0_13 = arith.constant 0 : index
    %12 = vector.load %arg7[%c0_12, %c0_13] : memref<128x128xf32, #tpu.memory_space<vmem>>, vector<128x128xf32>
    %cst_14 = arith.constant dense<0.000000e+00> : vector<64x128xf32>
    %13 = tpu.matmul %1, %12, %cst_14 {dimension_numbers = #tpu.dot_dimension_numbers<[1], [0], [0], [1], [0, 0, 1, 1], [], []>} : vector<64x128xf32>, vector<128x128xf32>, vector<64x128xf32> -> vector<64x128xf32>
    %c0_15 = arith.constant 0 : index
    %c0_16 = arith.constant 0 : index
    %14 = vector.load %arg8[%c0_15, %c0_16] : memref<1x128xf32, #tpu.memory_space<vmem>>, vector<1x128xf32>
    %15 = vector.broadcast %14 : vector<1x128xf32> to vector<64x128xf32>
    %16 = arith.addf %13, %15 : vector<64x128xf32>
    %17 = vector.shape_cast %11 : vector<64x128xf32> to vector<8x8x128xf32>
    %18 = vector.shape_cast %16 : vector<64x128xf32> to vector<8x8x128xf32>
    %19 = vector.shape_cast %6 : vector<8x128xf32> to vector<8x1x128xf32>
    %20 = vector.broadcast %19 : vector<8x1x128xf32> to vector<8x8x128xf32>
    %21 = arith.mulf %17, %20 : vector<8x8x128xf32>
    %22 = vector.shape_cast %21 : vector<8x8x128xf32> to vector<64x128xf32>
    %c0_17 = arith.constant 0 : index
    %c0_18 = arith.constant 0 : index
    %23 = vector.load %arg11[%c0_17, %c0_18] : memref<128x4xf32, #tpu.memory_space<vmem>>, vector<128x4xf32>
    %cst_19 = arith.constant dense<0.000000e+00> : vector<64x4xf32>
    %24 = tpu.matmul %22, %23, %cst_19 {dimension_numbers = #tpu.dot_dimension_numbers<[1], [0], [0], [1], [0, 0, 1, 1], [], []>} : vector<64x128xf32>, vector<128x4xf32>, vector<64x4xf32> -> vector<64x4xf32>
    %25 = vector.shape_cast %24 : vector<64x4xf32> to vector<8x8x4xf32>
    %cst_20 = arith.constant dense<0xFF800000> : vector<8x4xf32>
    %26 = vector.multi_reduction <maximumf>, %25, %cst_20 [1] : vector<8x8x4xf32> to vector<8x4xf32>
    %27 = vector.shape_cast %26 : vector<8x4xf32> to vector<8x1x4xf32>
    %28 = vector.broadcast %27 : vector<8x1x4xf32> to vector<8x8x4xf32>
    %29 = arith.subf %25, %28 : vector<8x8x4xf32>
    %30 = math.exp %29 : vector<8x8x4xf32>
    %cst_21 = arith.constant dense<0.000000e+00> : vector<8x4xf32>
    %31 = vector.multi_reduction <add>, %30, %cst_21 [1] : vector<8x8x4xf32> to vector<8x4xf32>
    %32 = vector.shape_cast %31 : vector<8x4xf32> to vector<8x1x4xf32>
    %33 = vector.broadcast %32 : vector<8x1x4xf32> to vector<8x8x4xf32>
    %34 = arith.divf %30, %33 : vector<8x8x4xf32>
    %35 = vector.shape_cast %34 : vector<8x8x4xf32> to vector<64x4xf32>
    %c0_22 = arith.constant 0 : index
    %c0_23 = arith.constant 0 : index
    %36 = vector.load %arg12[%c0_22, %c0_23] : memref<4x128xf32, #tpu.memory_space<vmem>>, vector<4x128xf32>
    %cst_24 = arith.constant dense<0.000000e+00> : vector<64x128xf32>
    %37 = tpu.matmul %35, %36, %cst_24 {dimension_numbers = #tpu.dot_dimension_numbers<[1], [0], [0], [1], [0, 0, 1, 1], [], []>} : vector<64x4xf32>, vector<4x128xf32>, vector<64x128xf32> -> vector<64x128xf32>
    %38 = vector.shape_cast %37 : vector<64x128xf32> to vector<8x8x128xf32>
    %39 = arith.mulf %38, %18 : vector<8x8x128xf32>
    %cst_25 = arith.constant dense<0.000000e+00> : vector<8x128xf32>
    %40 = vector.multi_reduction <add>, %39, %cst_25 [1] : vector<8x8x128xf32> to vector<8x128xf32>
    %c0_26 = arith.constant 0 : index
    %c0_27 = arith.constant 0 : index
    %41 = vector.load %arg9[%c0_26, %c0_27] : memref<128x128xf32, #tpu.memory_space<vmem>>, vector<128x128xf32>
    %cst_28 = arith.constant dense<0.000000e+00> : vector<8x128xf32>
    %42 = tpu.matmul %40, %41, %cst_28 {dimension_numbers = #tpu.dot_dimension_numbers<[1], [0], [0], [1], [0, 0, 1, 1], [], []>} : vector<8x128xf32>, vector<128x128xf32>, vector<8x128xf32> -> vector<8x128xf32>
    %c0_29 = arith.constant 0 : index
    %c0_30 = arith.constant 0 : index
    %43 = vector.load %arg10[%c0_29, %c0_30] : memref<1x128xf32, #tpu.memory_space<vmem>>, vector<1x128xf32>
    %44 = vector.broadcast %43 : vector<1x128xf32> to vector<8x128xf32>
    %45 = arith.addf %42, %44 : vector<8x128xf32>
    %c0_31 = arith.constant 0 : index
    %c0_32 = arith.constant 0 : index
    %46 = vector.load %arg13[%c0_31, %c0_32] : memref<8x128xf32, #tpu.memory_space<vmem>>, vector<8x128xf32>
    tpu.vector_store %arg13[%c0_31, %c0_32], %45 {strides = array<i32>} : memref<8x128xf32, #tpu.memory_space<vmem>>, vector<8x128xf32>,
    return
  }
  func.func @transform_0(%arg0: i32) -> (i32, i32) {
    %c0_i32 = arith.constant 0 : i32
    %c0_i32_0 = arith.constant 0 : i32
    return %arg0, %c0_i32 : i32, i32
  }
  func.func @transform_1(%arg0: i32) -> (i32, i32) {
    %c0_i32 = arith.constant 0 : i32
    %c0_i32_0 = arith.constant 0 : i32
    return %arg0, %c0_i32 : i32, i32
  }
  func.func @transform_2(%arg0: i32) -> (i32, i32) {
    %c0_i32 = arith.constant 0 : i32
    %c0_i32_0 = arith.constant 0 : i32
    %c0_i32_1 = arith.constant 0 : i32
    return %c0_i32, %c0_i32_0 : i32, i32
  }
  func.func @transform_3(%arg0: i32) -> (i32, i32) {
    %c0_i32 = arith.constant 0 : i32
    %c0_i32_0 = arith.constant 0 : i32
    %c0_i32_1 = arith.constant 0 : i32
    return %c0_i32, %c0_i32_0 : i32, i32
  }
  func.func @transform_4(%arg0: i32) -> (i32, i32) {
    %c0_i32 = arith.constant 0 : i32
    %c0_i32_0 = arith.constant 0 : i32
    %c0_i32_1 = arith.constant 0 : i32
    return %c0_i32, %c0_i32_0 : i32, i32
  }
  func.func @transform_5(%arg0: i32) -> (i32, i32) {
    %c0_i32 = arith.constant 0 : i32
    %c0_i32_0 = arith.constant 0 : i32
    %c0_i32_1 = arith.constant 0 : i32
    return %c0_i32, %c0_i32_0 : i32, i32
  }
  func.func @transform_6(%arg0: i32) -> (i32, i32) {
    %c0_i32 = arith.constant 0 : i32
    %c0_i32_0 = arith.constant 0 : i32
    %c0_i32_1 = arith.constant 0 : i32
    return %c0_i32, %c0_i32_0 : i32, i32
  }
  func.func @transform_7(%arg0: i32) -> (i32, i32) {
    %c0_i32 = arith.constant 0 : i32
    %c0_i32_0 = arith.constant 0 : i32
    %c0_i32_1 = arith.constant 0 : i32
    return %c0_i32, %c0_i32_0 : i32, i32
  }
  func.func @transform_8(%arg0: i32) -> (i32, i32) {
    %c0_i32 = arith.constant 0 : i32
    %c0_i32_0 = arith.constant 0 : i32
    %c0_i32_1 = arith.constant 0 : i32
    return %c0_i32, %c0_i32_0 : i32, i32
  }
  func.func @transform_9(%arg0: i32) -> (i32, i32) {
    %c0_i32 = arith.constant 0 : i32
    %c0_i32_0 = arith.constant 0 : i32
    %c0_i32_1 = arith.constant 0 : i32
    return %c0_i32, %c0_i32_0 : i32, i32
  }
  func.func @transform_10(%arg0: i32) -> (i32, i32) {
    %c0_i32 = arith.constant 0 : i32
    %c0_i32_0 = arith.constant 0 : i32
    %c0_i32_1 = arith.constant 0 : i32
    return %c0_i32, %c0_i32_0 : i32, i32
  }
  func.func @transform_11(%arg0: i32) -> (i32, i32) {
    %c0_i32 = arith.constant 0 : i32
    %c0_i32_0 = arith.constant 0 : i32
    %c0_i32_1 = arith.constant 0 : i32
    return %c0_i32, %c0_i32_0 : i32, i32
  }
  func.func @transform_12(%arg0: i32) -> (i32, i32) {
    %c0_i32 = arith.constant 0 : i32
    %c0_i32_0 = arith.constant 0 : i32
    return %arg0, %c0_i32 : i32, i32
  }
}

</mosaic_0001>

<llo_original>
// kernel: tpu_custom_call.1
$region0: #{tpu_custom_call.1}
  #allocation0 [shape = 'u32[]', space=smem, size = 0x4, offset = 0x4, fixed_abs, tag = 'smem constant byte address 0x4 - core index']
  #allocation1 [shape = 'u32[144,128]{1,0:T(1,128)}', space=vmem, size = 0x12000, scoped, tag = 'internal scratch']
  %s0 = inlined_call_operand.hbm [shape: f32[16,128], index: 0, kind: input, shape index: {}]
  %s1 = inlined_call_operand.vmem [shape: f32[128,128], index: 1, kind: input, shape index: {}]
  %s2 = inlined_call_operand.hbm [shape: f32[128,128], index: 2, kind: input, shape index: {}]
  %s3 = inlined_call_operand.vmem [shape: f32[1,128], index: 3, kind: input, shape index: {}]
  %s4 = inlined_call_operand.hbm [shape: f32[128,128], index: 4, kind: input, shape index: {}]
  %s5 = inlined_call_operand.vmem [shape: f32[1,128], index: 5, kind: input, shape index: {}]
  %s6 = inlined_call_operand.hbm [shape: f32[128,128], index: 6, kind: input, shape index: {}]
  %s7 = inlined_call_operand.vmem [shape: f32[1,128], index: 7, kind: input, shape index: {}]
  %s8 = inlined_call_operand.hbm [shape: f32[128,128], index: 8, kind: input, shape index: {}]
  %s9 = inlined_call_operand.vmem [shape: f32[1,128], index: 9, kind: input, shape index: {}]
  %s10 = inlined_call_operand.vmem [shape: f32[128,4], index: 10, kind: input, shape index: {}]
  %s11 = inlined_call_operand.vmem [shape: f32[4,128], index: 11, kind: input, shape index: {}]
  %s12 = inlined_call_operand.hbm [shape: f32[16,128], index: 12, kind: output, shape index: {}]
  %s13 = sld [smem:[#allocation0]]
  $region101: #{tpu_custom_call.1} parent=0
    _
  %s15 = ssub.s32 1, %s13
  %s16 = scalar_select 0, %s15, %s13
  $region1: #{tpu_custom_call.1} parent=0
    #allocation2 [shape = 'u8[8192]{0}', space=vmem, size = 0x2000, scoped, tag = 'input window, operand 0']
    #allocation3 [shape = 's32[2]{0}', space=sflag, size = 0x8, scoped, tag = 'scoped memory for tpu_custom_call.1']
    #allocation4 [shape = 's32[2]{0}', space=sflag, size = 0x8, scoped, tag = 'scoped memory for tpu_custom_call.1']
    #allocation5 [shape = 'u8[65536]{0}', space=vmem, size = 0x10000, scoped, tag = 'input window, operand 2, single buffered']
    #allocation6 [shape = 's32[1]{0}', space=sflag, size = 0x4, scoped, tag = 'scoped memory for tpu_custom_call.1']
    #allocation7 [shape = 'u8[65536]{0}', space=vmem, size = 0x10000, scoped, tag = 'input window, operand 4, single buffered']
    #allocation8 [shape = 'u8[65536]{0}', space=vmem, size = 0x10000, scoped, tag = 'input window, operand 6, single buffered']
    #allocation9 [shape = 's32[1]{0}', space=sflag, size = 0x4, scoped, tag = 'scoped memory for tpu_custom_call.1']
    #allocation10 [shape = 'u8[65536]{0}', space=vmem, size = 0x10000, scoped, tag = 'input window, operand 8, single buffered']
    #allocation11 [shape = 'u8[8192]{0}', space=vmem, size = 0x2000, scoped, tag = 'output window, operand 0']
    %17 = vsyncpa [#allocation3], 0
    %s18 = scalar_lea.sflag [#allocation3], 1
    %19 = vsyncpa %s18, 0
    %20 = vsyncpa [#allocation6], 0
    %21 = vsyncpa [#allocation9], 0
    %22 = vsyncpa [#allocation4], 0
    %s23 = scalar_lea.sflag [#allocation4], 1
    %24 = vsyncpa %s23, 0
    loop: start=0, step=1, limit=4
    $region2: #{tpu_custom_call.1} parent=1 // loop_pre_header
      _
    $region3: #{tpu_custom_call.1} parent=1 // loop_header
      %s26 = sphi 0, %s30
      %p27 = scmp.ge.s32.totalorder %s26, 4
      %s36 = sphi 0, %s38
      %s39 = sphi 0, %s36
      %s40 = sphi 0, %s39
      %s56 = sphi 0, %s40
      %s62 = sphi 0, %s64
      %s65 = sphi 0, %s62
      %s66 = sphi 0, %s65
      %s82 = sphi 0, %s66
      %s86 = sphi 0, %s86
      %s88 = sphi 0, %s86
      %s89 = sphi 0, %s88
      %s103 = sphi 0, %s89
      %s107 = sphi 0, %s107
      %s109 = sphi 0, %s107
      %s110 = sphi 0, %s109
      %s124 = sphi 0, %s110
      %s128 = sphi 0, %s128
      %s130 = sphi 0, %s128
      %s131 = sphi 0, %s130
      %s145 = sphi 0, %s131
      %s149 = sphi 0, %s149
      %s151 = sphi 0, %s149
      %s152 = sphi 0, %s151
      %s166 = sphi 0, %s152
      %s170 = sphi 0, %s170
      %s172 = sphi 0, %s170
      %s173 = sphi 0, %s172
      %s187 = sphi 0, %s173
      %s191 = sphi 0, %s191
      %s193 = sphi 0, %s191
      %s194 = sphi 0, %s193
      %s208 = sphi 0, %s194
      %s212 = sphi 0, %s212
      %s214 = sphi 0, %s212
      %s215 = sphi 0, %s214
      %s229 = sphi 0, %s215
      %s233 = sphi 0, %s233
      %s235 = sphi 0, %s233
      %s236 = sphi 0, %s235
      %s250 = sphi 0, %s236
      %s254 = sphi 0, %s254
      %s256 = sphi 0, %s254
      %s257 = sphi 0, %s256
      %s271 = sphi 0, %s257
      %s275 = sphi 0, %s275
      %s277 = sphi 0, %s275
      %s278 = sphi 0, %s277
      %s292 = sphi 0, %s278
      %s298 = sphi 0, %s300
      %s301 = sphi 0, %s298
      %s302 = sphi 0, %s301
      %s318 = sphi 0, %s302
    $region4: #{tpu_custom_call.1} parent=1 // loop_header_branch
      %29 = sbr.rel (%p27) target = $region8
    $region5: #{tpu_custom_call.1} parent=1 // loop_body
      %s31 = ssub.s32 %s26, 1
      %s32 = ssub.s32 %s26, 2
      %s33 = sadd.s32 %s26, 1
      %s34 = ssub.s32 %s26, %s33
      %p35 = scmp.eq.s32.totalorder %s34, 0
      %s37 = sadd.s32 %s36, 1
      %s38 = scalar_select %p35, %s36, %s37
      %p41 = pneg %p35
      %p42 = scmp.eq.s32.totalorder %s26, 1
      %p43 = por %p41, %p42
      %p44 = scmp.ne.s32.totalorder %s36, %s39
      %p45 = scmp.eq.s32.totalorder %s26, 0
      %p46 = por %p44, %p45
      %p47 = scmp.ne.s32.totalorder %s36, %s39
      %p48 = scmp.eq.s32.totalorder %s31, 1
      %p49 = por %p47, %p48
      %p50 = scmp.ne.s32.totalorder %s39, %s40
      %p51 = scmp.eq.s32.totalorder %s31, 0
      %p52 = por %p50, %p51
      %p53 = scmp.ne.s32.totalorder %s39, %s40
      %p54 = scmp.eq.s32.totalorder %s32, 1
      %p55 = por %p53, %p54
      %p57 = scmp.ne.s32.totalorder %s40, %s56
      %p58 = scmp.eq.s32.totalorder %s32, 0
      %p59 = por %p57, %p58
      %s60 = ssub.s32 %s26, %s33
      %p61 = scmp.eq.s32.totalorder %s60, 0
      %s63 = sadd.s32 %s62, 1
      %s64 = scalar_select %p61, %s62, %s63
      %p67 = pneg %p61
      %p68 = scmp.eq.s32.totalorder %s26, 1
      %p69 = por %p67, %p68
      %p70 = scmp.ne.s32.totalorder %s62, %s65
      %p71 = scmp.eq.s32.totalorder %s26, 0
      %p72 = por %p70, %p71
      %p73 = scmp.ne.s32.totalorder %s62, %s65
      %p74 = scmp.eq.s32.totalorder %s31, 1
      %p75 = por %p73, %p74
      %p76 = scmp.ne.s32.totalorder %s65, %s66
      %p77 = scmp.eq.s32.totalorder %s31, 0
      %p78 = por %p76, %p77
      %p79 = scmp.ne.s32.totalorder %s65, %s66
      %p80 = scmp.eq.s32.totalorder %s32, 1
      %p81 = por %p79, %p80
      %p83 = scmp.ne.s32.totalorder %s66, %s82
      %p84 = scmp.eq.s32.totalorder %s32, 0
      %p85 = por %p83, %p84
      %s87 = sadd.s32 %s86, 1
      %p90 = scmp.eq.s32.totalorder %s26, 1
      %p91 = scmp.ne.s32.totalorder %s86, %s88
      %p92 = scmp.eq.s32.totalorder %s26, 0
      %p93 = por %p91, %p92
      %p94 = scmp.ne.s32.totalorder %s86, %s88
      %p95 = scmp.eq.s32.totalorder %s31, 1
      %p96 = por %p94, %p95
      %p97 = scmp.ne.s32.totalorder %s88, %s89
      %p98 = scmp.eq.s32.totalorder %s31, 0
      %p99 = por %p97, %p98
      %p100 = scmp.ne.s32.totalorder %s88, %s89
      %p101 = scmp.eq.s32.totalorder %s32, 1
      %p102 = por %p100, %p101
      %p104 = scmp.ne.s32.totalorder %s89, %s103
      %p105 = scmp.eq.s32.totalorder %s32, 0
      %p106 = por %p104, %p105
      %s108 = sadd.s32 %s107, 1
      %p111 = scmp.eq.s32.totalorder %s26, 1
      %p112 = scmp.ne.s32.totalorder %s107, %s109
      %p113 = scmp.eq.s32.totalorder %s26, 0
      %p114 = por %p112, %p113
      %p115 = scmp.ne.s32.totalorder %s107, %s109
      %p116 = scmp.eq.s32.totalorder %s31, 1
      %p117 = por %p115, %p116
      %p118 = scmp.ne.s32.totalorder %s109, %s110
      %p119 = scmp.eq.s32.totalorder %s31, 0
      %p120 = por %p118, %p119
      %p121 = scmp.ne.s32.totalorder %s109, %s110
      %p122 = scmp.eq.s32.totalorder %s32, 1
      %p123 = por %p121, %p122
      %p125 = scmp.ne.s32.totalorder %s110, %s124
      %p126 = scmp.eq.s32.totalorder %s32, 0
      %p127 = por %p125, %p126
      %s129 = sadd.s32 %s128, 1
      %p132 = scmp.eq.s32.totalorder %s26, 1
      %p133 = scmp.ne.s32.totalorder %s128, %s130
      %p134 = scmp.eq.s32.totalorder %s26, 0
      %p135 = por %p133, %p134
      %p136 = scmp.ne.s32.totalorder %s128, %s130
      %p137 = scmp.eq.s32.totalorder %s31, 1
      %p138 = por %p136, %p137
      %p139 = scmp.ne.s32.totalorder %s130, %s131
      %p140 = scmp.eq.s32.totalorder %s31, 0
      %p141 = por %p139, %p140
      %p142 = scmp.ne.s32.totalorder %s130, %s131
      %p143 = scmp.eq.s32.totalorder %s32, 1
      %p144 = por %p142, %p143
      %p146 = scmp.ne.s32.totalorder %s131, %s145
      %p147 = scmp.eq.s32.totalorder %s32, 0
      %p148 = por %p146, %p147
      %s150 = sadd.s32 %s149, 1
      %p153 = scmp.eq.s32.totalorder %s26, 1
      %p154 = scmp.ne.s32.totalorder %s149, %s151
      %p155 = scmp.eq.s32.totalorder %s26, 0
      %p156 = por %p154, %p155
      %p157 = scmp.ne.s32.totalorder %s149, %s151
      %p158 = scmp.eq.s32.totalorder %s31, 1
      %p159 = por %p157, %p158
      %p160 = scmp.ne.s32.totalorder %s151, %s152
      %p161 = scmp.eq.s32.totalorder %s31, 0
      %p162 = por %p160, %p161
      %p163 = scmp.ne.s32.totalorder %s151, %s152
      %p164 = scmp.eq.s32.totalorder %s32, 1
      %p165 = por %p163, %p164
      %p167 = scmp.ne.s32.totalorder %s152, %s166
      %p168 = scmp.eq.s32.totalorder %s32, 0
      %p169 = por %p167, %p168
      %s171 = sadd.s32 %s170, 1
      %p174 = scmp.eq.s32.totalorder %s26, 1
      %p175 = scmp.ne.s32.totalorder %s170, %s172
      %p176 = scmp.eq.s32.totalorder %s26, 0
      %p177 = por %p175, %p176
      %p178 = scmp.ne.s32.totalorder %s170, %s172
      %p179 = scmp.eq.s32.totalorder %s31, 1
      %p180 = por %p178, %p179
      %p181 = scmp.ne.s32.totalorder %s172, %s173
      %p182 = scmp.eq.s32.totalorder %s31, 0
      %p183 = por %p181, %p182
      %p184 = scmp.ne.s32.totalorder %s172, %s173
      %p185 = scmp.eq.s32.totalorder %s32, 1
      %p186 = por %p184, %p185
      %p188 = scmp.ne.s32.totalorder %s173, %s187
      %p189 = scmp.eq.s32.totalorder %s32, 0
      %p190 = por %p188, %p189
      %s192 = sadd.s32 %s191, 1
      %p195 = scmp.eq.s32.totalorder %s26, 1
      %p196 = scmp.ne.s32.totalorder %s191, %s193
      %p197 = scmp.eq.s32.totalorder %s26, 0
      %p198 = por %p196, %p197
      %p199 = scmp.ne.s32.totalorder %s191, %s193
      %p200 = scmp.eq.s32.totalorder %s31, 1
      %p201 = por %p199, %p200
      %p202 = scmp.ne.s32.totalorder %s193, %s194
      %p203 = scmp.eq.s32.totalorder %s31, 0
      %p204 = por %p202, %p203
      %p205 = scmp.ne.s32.totalorder %s193, %s194
      %p206 = scmp.eq.s32.totalorder %s32, 1
      %p207 = por %p205, %p206
      %p209 = scmp.ne.s32.totalorder %s194, %s208
      %p210 = scmp.eq.s32.totalorder %s32, 0
      %p211 = por %p209, %p210
      %s213 = sadd.s32 %s212, 1
      %p216 = scmp.eq.s32.totalorder %s26, 1
      %p217 = scmp.ne.s32.totalorder %s212, %s214
      %p218 = scmp.eq.s32.totalorder %s26, 0
      %p219 = por %p217, %p218
      %p220 = scmp.ne.s32.totalorder %s212, %s214
      %p221 = scmp.eq.s32.totalorder %s31, 1
      %p222 = por %p220, %p221
      %p223 = scmp.ne.s32.totalorder %s214, %s215
      %p224 = scmp.eq.s32.totalorder %s31, 0
      %p225 = por %p223, %p224
      %p226 = scmp.ne.s32.totalorder %s214, %s215
      %p227 = scmp.eq.s32.totalorder %s32, 1
      %p228 = por %p226, %p227
      %p230 = scmp.ne.s32.totalorder %s215, %s229
      %p231 = scmp.eq.s32.totalorder %s32, 0
      %p232 = por %p230, %p231
      %s234 = sadd.s32 %s233, 1
      %p237 = scmp.eq.s32.totalorder %s26, 1
      %p238 = scmp.ne.s32.totalorder %s233, %s235
      %p239 = scmp.eq.s32.totalorder %s26, 0
      %p240 = por %p238, %p239
      %p241 = scmp.ne.s32.totalorder %s233, %s235
      %p242 = scmp.eq.s32.totalorder %s31, 1
      %p243 = por %p241, %p242
      %p244 = scmp.ne.s32.totalorder %s235, %s236
      %p245 = scmp.eq.s32.totalorder %s31, 0
      %p246 = por %p244, %p245
      %p247 = scmp.ne.s32.totalorder %s235, %s236
      %p248 = scmp.eq.s32.totalorder %s32, 1
      %p249 = por %p247, %p248
      %p251 = scmp.ne.s32.totalorder %s236, %s250
      %p252 = scmp.eq.s32.totalorder %s32, 0
      %p253 = por %p251, %p252
      %s255 = sadd.s32 %s254, 1
      %p258 = scmp.eq.s32.totalorder %s26, 1
      %p259 = scmp.ne.s32.totalorder %s254, %s256
      %p260 = scmp.eq.s32.totalorder %s26, 0
      %p261 = por %p259, %p260
      %p262 = scmp.ne.s32.totalorder %s254, %s256
      %p263 = scmp.eq.s32.totalorder %s31, 1
      %p264 = por %p262, %p263
      %p265 = scmp.ne.s32.totalorder %s256, %s257
      %p266 = scmp.eq.s32.totalorder %s31, 0
      %p267 = por %p265, %p266
      %p268 = scmp.ne.s32.totalorder %s256, %s257
      %p269 = scmp.eq.s32.totalorder %s32, 1
      %p270 = por %p268, %p269
      %p272 = scmp.ne.s32.totalorder %s257, %s271
      %p273 = scmp.eq.s32.totalorder %s32, 0
      %p274 = por %p272, %p273
      %s276 = sadd.s32 %s275, 1
      %p279 = scmp.eq.s32.totalorder %s26, 1
      %p280 = scmp.ne.s32.totalorder %s275, %s277
      %p281 = scmp.eq.s32.totalorder %s26, 0
      %p282 = por %p280, %p281
      %p283 = scmp.ne.s32.totalorder %s275, %s277
      %p284 = scmp.eq.s32.totalorder %s31, 1
      %p285 = por %p283, %p284
      %p286 = scmp.ne.s32.totalorder %s277, %s278
      %p287 = scmp.eq.s32.totalorder %s31, 0
      %p288 = por %p286, %p287
      %p289 = scmp.ne.s32.totalorder %s277, %s278
      %p290 = scmp.eq.s32.totalorder %s32, 1
      %p291 = por %p289, %p290
      %p293 = scmp.ne.s32.totalorder %s278, %s292
      %p294 = scmp.eq.s32.totalorder %s32, 0
      %p295 = por %p293, %p294
      %s296 = ssub.s32 %s26, %s33
      %p297 = scmp.eq.s32.totalorder %s296, 0
      %s299 = sadd.s32 %s298, 1
      %s300 = scalar_select %p297, %s298, %s299
      %p303 = pneg %p297
      %p304 = scmp.eq.s32.totalorder %s26, 1
      %p305 = por %p303, %p304
      %p306 = scmp.ne.s32.totalorder %s298, %s301
      %p307 = scmp.eq.s32.totalorder %s26, 0
      %p308 = por %p306, %p307
      %p309 = scmp.ne.s32.totalorder %s298, %s301
      %p310 = scmp.eq.s32.totalorder %s31, 1
      %p311 = por %p309, %p310
      %p312 = scmp.ne.s32.totalorder %s301, %s302
      %p313 = scmp.eq.s32.totalorder %s31, 0
      %p314 = por %p312, %p313
      %p315 = scmp.ne.s32.totalorder %s301, %s302
      %p316 = scmp.eq.s32.totalorder %s32, 1
      %p317 = por %p315, %p316
      %p319 = scmp.ne.s32.totalorder %s302, %s318
      %p320 = scmp.eq.s32.totalorder %s32, 0
      %p321 = por %p319, %p320
      %p322 = scmp.le.s32.totalorder 1, %s26
      %p323 = scmp.lt.s32.totalorder %s26, 3
      %p324 = pnand %p322, %p323
      %p325 = pneg %p324
      // Predicated region
      $region9: #{tpu_custom_call.1} parent=5 // pred_check
        _
      $region10: #{tpu_custom_call.1} parent=5 // pred_check_branch
        %327 = sbr.rel (%p324) target = $region12
      $region11: #{tpu_custom_call.1} parent=5 // pred_region
        %s328 = ssub.s32 %s26, 1
        // Predicated region
        $region13: #{tpu_custom_call.1} parent=11 // pred_check
          %p329 = pneg %p99
        $region14: #{tpu_custom_call.1} parent=11 // pred_check_branch
          %331 = sbr.rel (%p329) target = $region16
        $region15: #{tpu_custom_call.1} parent=11 // pred_region
          %s333 = ssub.s32 2048, 2048
          %334 = vsyncadd [#allocation6], %s333
          %s335 = sshll.u32 [#allocation5], 4
          %s336 = int_to_ptr.vmem [resolvable:$true] %s335
          %341 = dma.hbm_to_vmem [thread:$0]  %s2, 2048, %s336, [#allocation6], 128, 128, 8
        $region16: #{tpu_custom_call.1} parent=11 // pred_fallthru
          _
        // Predicated region
        $region17: #{tpu_custom_call.1} parent=11 // pred_check
          %p342 = pneg %p120
        $region18: #{tpu_custom_call.1} parent=11 // pred_check_branch
          %344 = sbr.rel (%p342) target = $region20
        $region19: #{tpu_custom_call.1} parent=11 // pred_region
          _
        $region20: #{tpu_custom_call.1} parent=11 // pred_fallthru
          _
        // Predicated region
        $region21: #{tpu_custom_call.1} parent=11 // pred_check
          %p345 = pneg %p141
        $region22: #{tpu_custom_call.1} parent=11 // pred_check_branch
          %347 = sbr.rel (%p345) target = $region24
        $region23: #{tpu_custom_call.1} parent=11 // pred_region
          %s349 = ssub.s32 2048, 2048
          %350 = vsyncadd [#allocation6], %s349
          %s351 = sshll.u32 [#allocation7], 4
          %s352 = int_to_ptr.vmem [resolvable:$true] %s351
          %357 = dma.hbm_to_vmem [thread:$0]  %s4, 2048, %s352, [#allocation6], 128, 128, 8
        $region24: #{tpu_custom_call.1} parent=11 // pred_fallthru
          _
        // Predicated region
        $region25: #{tpu_custom_call.1} parent=11 // pred_check
          %p358 = pneg %p162
        $region26: #{tpu_custom_call.1} parent=11 // pred_check_branch
          %360 = sbr.rel (%p358) target = $region28
        $region27: #{tpu_custom_call.1} parent=11 // pred_region
          _
        $region28: #{tpu_custom_call.1} parent=11 // pred_fallthru
          _
        // Predicated region
        $region29: #{tpu_custom_call.1} parent=11 // pred_check
          %p361 = pneg %p183
        $region30: #{tpu_custom_call.1} parent=11 // pred_check_branch
          %363 = sbr.rel (%p361) target = $region32
        $region31: #{tpu_custom_call.1} parent=11 // pred_region
          %s365 = ssub.s32 2048, 2048
          %366 = vsyncadd [#allocation9], %s365
          %s367 = sshll.u32 [#allocation8], 4
          %s368 = int_to_ptr.vmem [resolvable:$true] %s367
          %373 = dma.hbm_to_vmem [thread:$0]  %s6, 2048, %s368, [#allocation9], 128, 128, 8
        $region32: #{tpu_custom_call.1} parent=11 // pred_fallthru
          _
        // Predicated region
        $region33: #{tpu_custom_call.1} parent=11 // pred_check
          %p374 = pneg %p204
        $region34: #{tpu_custom_call.1} parent=11 // pred_check_branch
          %376 = sbr.rel (%p374) target = $region36
        $region35: #{tpu_custom_call.1} parent=11 // pred_region
          _
        $region36: #{tpu_custom_call.1} parent=11 // pred_fallthru
          _
        // Predicated region
        $region37: #{tpu_custom_call.1} parent=11 // pred_check
          %p377 = pneg %p225
        $region38: #{tpu_custom_call.1} parent=11 // pred_check_branch
          %379 = sbr.rel (%p377) target = $region40
        $region39: #{tpu_custom_call.1} parent=11 // pred_region
          %s381 = ssub.s32 2048, 2048
          %382 = vsyncadd [#allocation9], %s381
          %s383 = sshll.u32 [#allocation10], 4
          %s384 = int_to_ptr.vmem [resolvable:$true] %s383
          %389 = dma.hbm_to_vmem [thread:$0]  %s8, 2048, %s384, [#allocation9], 128, 128, 8
        $region40: #{tpu_custom_call.1} parent=11 // pred_fallthru
          _
        // Predicated region
        $region41: #{tpu_custom_call.1} parent=11 // pred_check
          %p390 = pneg %p246
        $region42: #{tpu_custom_call.1} parent=11 // pred_check_branch
          %392 = sbr.rel (%p390) target = $region44
        $region43: #{tpu_custom_call.1} parent=11 // pred_region
          _
        $region44: #{tpu_custom_call.1} parent=11 // pred_fallthru
          _
        // Predicated region
        $region45: #{tpu_custom_call.1} parent=11 // pred_check
          %p393 = pneg %p267
        $region46: #{tpu_custom_call.1} parent=11 // pred_check_branch
          %395 = sbr.rel (%p393) target = $region48
        $region47: #{tpu_custom_call.1} parent=11 // pred_region
          _
        $region48: #{tpu_custom_call.1} parent=11 // pred_fallthru
          _
        // Predicated region
        $region49: #{tpu_custom_call.1} parent=11 // pred_check
          %p396 = pneg %p288
        $region50: #{tpu_custom_call.1} parent=11 // pred_check_branch
          %398 = sbr.rel (%p396) target = $region52
        $region51: #{tpu_custom_call.1} parent=11 // pred_region
          _
        $region52: #{tpu_custom_call.1} parent=11 // pred_fallthru
          _
      $region12: #{tpu_custom_call.1} parent=5 // pred_fallthru
        _
      %p399 = scmp.lt.s32.totalorder %s26, 2
      // Predicated region
      $region53: #{tpu_custom_call.1} parent=5 // pred_check
        %p400 = pneg %p399
      $region54: #{tpu_custom_call.1} parent=5 // pred_check_branch
        %402 = sbr.rel (%p400) target = $region56
      $region55: #{tpu_custom_call.1} parent=5 // pred_region
        // Predicated region
        $region57: #{tpu_custom_call.1} parent=55 // pred_check
          %p403 = pneg %p46
        $region58: #{tpu_custom_call.1} parent=55 // pred_check_branch
          %405 = sbr.rel (%p403) target = $region60
        $region59: #{tpu_custom_call.1} parent=55 // pred_region
          %s406 = sand.u32 %s36, 1
          %s407 = scalar_lea.sflag [#allocation3], %s406
          %s408 = sand.u32 %s36, 1
          %s409 = smul.addr %s408, 8
          %s410 = scalar_lea.vmem [#allocation2], %s409
          %s412 = ssub.s32 128, 128
          %413 = vsyncadd %s407, %s412
          %s414 = smul.addr %s26, 128
          %s415 = scalar_lea.hbm %s0, %s414
          %s417 = sshll.u32 %s410, 4
          %s418 = int_to_ptr.vmem [resolvable:$true] %s417
          %420 = dma.hbm_to_vmem [thread:$0]  %s415, 128, %s418, %s407
        $region60: #{tpu_custom_call.1} parent=55 // pred_fallthru
          _
        // Predicated region
        $region61: #{tpu_custom_call.1} parent=55 // pred_check
          %p421 = pneg %p72
        $region62: #{tpu_custom_call.1} parent=55 // pred_check_branch
          %423 = sbr.rel (%p421) target = $region64
        $region63: #{tpu_custom_call.1} parent=55 // pred_region
          %s424 = smul.u32 8, %s26
          %p425 = scmp.lt.s32.totalorder %s424, 15
          %s426 = scalar_select %p425, %s424, 15
          %s427 = smul.addr %s426, 8
          %s428 = scalar_lea.vmem %s1, %s427
          %s429 = smul.u32 8, %s26
        $region64: #{tpu_custom_call.1} parent=55 // pred_fallthru
          _
      $region56: #{tpu_custom_call.1} parent=5 // pred_fallthru
        _
      %p430 = scmp.le.s32.totalorder 1, %s26
      %p431 = scmp.lt.s32.totalorder %s26, 3
      %p432 = pnand %p430, %p431
      %p433 = pneg %p432
      // Predicated region
      $region65: #{tpu_custom_call.1} parent=5 // pred_check
        _
      $region66: #{tpu_custom_call.1} parent=5 // pred_check_branch
        %435 = sbr.rel (%p432) target = $region68
      $region67: #{tpu_custom_call.1} parent=5 // pred_region
        %s436 = ssub.s32 %s26, 1
        %s437 = sand.u32 %s39, 1
        %s438 = scalar_lea.sflag [#allocation3], %s437
        %s439 = sand.u32 %s39, 1
        %s440 = smul.addr %s439, 8
        %s441 = scalar_lea.vmem [#allocation2], %s440
        // Predicated region
        $region69: #{tpu_custom_call.1} parent=67 // pred_check
          %p442 = pneg %p52
        $region70: #{tpu_custom_call.1} parent=67 // pred_check_branch
          %444 = sbr.rel (%p442) target = $region72
        $region71: #{tpu_custom_call.1} parent=67 // pred_region
          %445 = dma.done %s438, 128
        $region72: #{tpu_custom_call.1} parent=67 // pred_fallthru
          _
        // Predicated region
        $region73: #{tpu_custom_call.1} parent=67 // pred_check
          %p446 = pneg %p99
        $region74: #{tpu_custom_call.1} parent=67 // pred_check_branch
          %448 = sbr.rel (%p446) target = $region76
        $region75: #{tpu_custom_call.1} parent=67 // pred_region
          %449 = dma.done [#allocation6], 2048
        $region76: #{tpu_custom_call.1} parent=67 // pred_fallthru
          _
        // Predicated region
        $region77: #{tpu_custom_call.1} parent=67 // pred_check
          %p450 = pneg %p141
        $region78: #{tpu_custom_call.1} parent=67 // pred_check_branch
          %452 = sbr.rel (%p450) target = $region80
        $region79: #{tpu_custom_call.1} parent=67 // pred_region
          %453 = dma.done [#allocation6], 2048
        $region80: #{tpu_custom_call.1} parent=67 // pred_fallthru
          _
        // Predicated region
        $region81: #{tpu_custom_call.1} parent=67 // pred_check
          %p454 = pneg %p183
        $region82: #{tpu_custom_call.1} parent=67 // pred_check_branch
          %456 = sbr.rel (%p454) target = $region84
        $region83: #{tpu_custom_call.1} parent=67 // pred_region
          %457 = dma.done [#allocation9], 2048
        $region84: #{tpu_custom_call.1} parent=67 // pred_fallthru
          _
        // Predicated region
        $region85: #{tpu_custom_call.1} parent=67 // pred_check
          %p458 = pneg %p225
        $region86: #{tpu_custom_call.1} parent=67 // pred_check_branch
          %460 = sbr.rel (%p458) target = $region88
        $region87: #{tpu_custom_call.1} parent=67 // pred_region
          %461 = dma.done [#allocation9], 2048
        $region88: #{tpu_custom_call.1} parent=67 // pred_fallthru
          _
        %s462 = sand.u32 %s39, 1
        %s463 = scalar_lea.sflag [#allocation3], %s462
        %s464 = sand.u32 %s39, 1
        %s465 = smul.addr %s464, 8
        %s466 = scalar_lea.vmem [#allocation2], %s465
        %p467 = pneg %p52
        %p468 = pneg %p49
        %s469 = smul.u32 8, %s31
        %p470 = scmp.lt.s32.totalorder %s469, 15
        %s471 = scalar_select %p470, %s469, 15
        %s472 = smul.addr %s471, 8
        %s473 = scalar_lea.vmem %s1, %s472
        %p474 = pneg %p78
        %p475 = pneg %p75
        %p476 = pneg %p99
        %p477 = pneg %p96
        %p478 = pneg %p120
        %p479 = pneg %p117
        %p480 = pneg %p141
        %p481 = pneg %p138
        %p482 = pneg %p162
        %p483 = pneg %p159
        %p484 = pneg %p183
        %p485 = pneg %p180
        %p486 = pneg %p204
        %p487 = pneg %p201
        %p488 = pneg %p225
        %p489 = pneg %p222
        %p490 = pneg %p246
        %p491 = pneg %p243
        %p492 = pneg %p267
        %p493 = pneg %p264
        %p494 = pneg %p288
        %p495 = pneg %p285
        %p496 = pneg %p314
        %p497 = pneg %p311
        %s498 = sand.u32 %s301, 1
        %s499 = scalar_lea.sflag [#allocation4], %s498
        %s500 = sand.u32 %s301, 1
        %s501 = smul.addr %s500, 8
        %s502 = scalar_lea.vmem [#allocation11], %s501
        %s503 = smul.u32 8, %s31
        %p504 = scmp.lt.s32.totalorder %s503, 15
        %s505 = scalar_select %p504, %s503, 15
        %s506 = smul.addr %s505, 8
        %s507 = scalar_lea.vmem %s1, %s506
        %s508 = smul.u32 8, %s31
        %v509 = vld [vmem:[%s441] sm:$0xff]
        %v510 = vld [vmem:[%s507] sm:$0xff]
        %v511 = vld [vmem:[%s507 + $0x8] sm:$0xff]
        %v512 = vld [vmem:[%s507 + $0x10] sm:$0xff]
        %v513 = vld [vmem:[%s507 + $0x18] sm:$0xff]
        %v514 = vld [vmem:[%s507 + $0x20] sm:$0xff]
        %v515 = vld [vmem:[%s507 + $0x28] sm:$0xff]
        %v516 = vld [vmem:[%s507 + $0x30] sm:$0xff]
        %v517 = vld [vmem:[%s507 + $0x38] sm:$0xff]
        %v518 = vld [vmem:[#allocation5] sm:$0xff]
        %v519 = vld [vmem:[#allocation5 + $0x8] sm:$0xff]
        %v520 = vld [vmem:[#allocation5 + $0x10] sm:$0xff]
        %v521 = vld [vmem:[#allocation5 + $0x18] sm:$0xff]
        %v522 = vld [vmem:[#allocation5 + $0x20] sm:$0xff]
        %v523 = vld [vmem:[#allocation5 + $0x28] sm:$0xff]
        %v524 = vld [vmem:[#allocation5 + $0x30] sm:$0xff]
        %v525 = vld [vmem:[#allocation5 + $0x38] sm:$0xff]
        %v526 = vld [vmem:[#allocation5 + $0x40] sm:$0xff]
        %v527 = vld [vmem:[#allocation5 + $0x48] sm:$0xff]
        %v528 = vld [vmem:[#allocation5 + $0x50] sm:$0xff]
        %v529 = vld [vmem:[#allocation5 + $0x58] sm:$0xff]
        %v530 = vld [vmem:[#allocation5 + $0x60] sm:$0xff]
        %v531 = vld [vmem:[#allocation5 + $0x68] sm:$0xff]
        %v532 = vld [vmem:[#allocation5 + $0x70] sm:$0xff]
        %v533 = vld [vmem:[#allocation5 + $0x78] sm:$0xff]
        %v534 = vld [vmem:[%s3] sm:$0x1]
        %v536 = vlaneseq
        %v537 = vshrl.u32 %v536, 7
        %v538 = vsub.s32 0, %v537
        %v539 = vrot.slane %v534, %v538
        %541 = vmatprep.subr.mxu0 0.0
        %542 = vmatpush1.msra.mxu0 %v518
        %543 = vmatprep.subr.mxu0 0.0
        %544 = vmatpush1.msra.mxu0 %v519
        %545 = vmatprep.subr.mxu0 0.0
        %546 = vmatpush1.msra.mxu0 %v520
        %547 = vmatprep.subr.mxu0 0.0
        %548 = vmatpush1.msra.mxu0 %v521
        %549 = vmatprep.subr.mxu0 0.0
        %550 = vmatpush1.msra.mxu0 %v522
        %551 = vmatprep.subr.mxu0 0.0
        %552 = vmatpush1.msra.mxu0 %v523
        %553 = vmatprep.subr.mxu0 0.0
        %554 = vmatpush1.msra.mxu0 %v524
        %555 = vmatprep.subr.mxu0 0.0
        %556 = vmatpush1.msra.mxu0 %v525
        %557 = vmatprep.subr.mxu0 0.0
        %558 = vmatpush1.msra.mxu0 %v526
        %559 = vmatprep.subr.mxu0 0.0
        %560 = vmatpush1.msra.mxu0 %v527
        %561 = vmatprep.subr.mxu0 0.0
        %562 = vmatpush1.msra.mxu0 %v528
        %563 = vmatprep.subr.mxu0 0.0
        %564 = vmatpush1.msra.mxu0 %v529
        %565 = vmatprep.subr.mxu0 0.0
        %566 = vmatpush1.msra.mxu0 %v530
        %567 = vmatprep.subr.mxu0 0.0
        %568 = vmatpush1.msra.mxu0 %v531
        %569 = vmatprep.subr.mxu0 0.0
        %570 = vmatpush1.msra.mxu0 %v532
        %571 = vmatprep.subr.mxu0 0.0
        %572 = vmatpush1.msra.mxu0 %v533
        %573 = vmatprep.subr.mxu0 0.0
        %574 = vmatpush1.msra.mxu0 0.0
        %575 = vmatprep.subr.mxu0 0.0
        %576 = vmatpush1.msra.mxu0 0.0
        %577 = vmatprep.subr.mxu0 0.0
        %578 = vmatpush1.msra.mxu0 0.0
        %579 = vmatprep.subr.mxu0 0.0
        %580 = vmatpush1.msra.mxu0 0.0
        %581 = vmatprep.subr.mxu0 0.0
        %582 = vmatpush1.msra.mxu0 0.0
        %583 = vmatprep.subr.mxu0 0.0
        %584 = vmatpush1.msra.mxu0 0.0
        %585 = vmatprep.subr.mxu0 0.0
        %586 = vmatpush1.msra.mxu0 0.0
        %587 = vmatprep.subr.mxu0 0.0
        %588 = vmatpush1.msra.mxu0 0.0
        %589 = vmatprep.subr.mxu0 0.0
        %590 = vmatpush1.msra.mxu0 0.0
        %591 = vmatprep.subr.mxu0 0.0
        %592 = vmatpush1.msra.mxu0 0.0
        %593 = vmatprep.subr.mxu0 0.0
        %594 = vmatpush1.msra.mxu0 0.0
        %595 = vmatprep.subr.mxu0 0.0
        %596 = vmatpush1.msra.mxu0 0.0
        %597 = vmatprep.subr.mxu0 0.0
        %598 = vmatpush1.msra.mxu0 0.0
        %599 = vmatprep.subr.mxu0 0.0
        %600 = vmatpush1.msra.mxu0 0.0
        %601 = vmatprep.subr.mxu0 0.0
        %602 = vmatpush1.msra.mxu0 0.0
        %603 = vmatprep.subr.mxu0 0.0
        %604 = vmatpush1.msra.mxu0 0.0
        %605 = vmatprep.mubr.f32.mxu0 0.0
        %606 = vmatmul.mubr.f32.gmra.mrb[0].mxu0 %v509
        %v607 = vpop.f32.mrb[0].mxu0
        %v608 = vadd.f32 %v539, %v607
        %v609 = vpop.f32.mrb[0].mxu0
        %610 = vdwg.mxu0
        %v611 = vld [vmem:[#allocation7] sm:$0xff]
        %v612 = vld [vmem:[#allocation7 + $0x8] sm:$0xff]
        %v613 = vld [vmem:[#allocation7 + $0x10] sm:$0xff]
        %v614 = vld [vmem:[#allocation7 + $0x18] sm:$0xff]
        %v615 = vld [vmem:[#allocation7 + $0x20] sm:$0xff]
        %v616 = vld [vmem:[#allocation7 + $0x28] sm:$0xff]
        %v617 = vld [vmem:[#allocation7 + $0x30] sm:$0xff]
        %v618 = vld [vmem:[#allocation7 + $0x38] sm:$0xff]
        %v619 = vld [vmem:[#allocation7 + $0x40] sm:$0xff]
        %v620 = vld [vmem:[#allocation7 + $0x48] sm:$0xff]
        %v621 = vld [vmem:[#allocation7 + $0x50] sm:$0xff]
        %v622 = vld [vmem:[#allocation7 + $0x58] sm:$0xff]
        %v623 = vld [vmem:[#allocation7 + $0x60] sm:$0xff]
        %v624 = vld [vmem:[#allocation7 + $0x68] sm:$0xff]
        %v625 = vld [vmem:[#allocation7 + $0x70] sm:$0xff]
        %v626 = vld [vmem:[#allocation7 + $0x78] sm:$0xff]
        %v627 = vld [vmem:[%s5] sm:$0x1]
        %v629 = vlaneseq
        %v630 = vshrl.u32 %v629, 7
        %v631 = vsub.s32 0, %v630
        %v632 = vrot.slane %v627, %v631
        %634 = vmatprep.subr.mxu0 0.0
        %635 = vmatpush1.msra.mxu0 %v611
        %636 = vmatprep.subr.mxu0 0.0
        %637 = vmatpush1.msra.mxu0 %v612
        %638 = vmatprep.subr.mxu0 0.0
        %639 = vmatpush1.msra.mxu0 %v613
        %640 = vmatprep.subr.mxu0 0.0
        %641 = vmatpush1.msra.mxu0 %v614
        %642 = vmatprep.subr.mxu0 0.0
        %643 = vmatpush1.msra.mxu0 %v615
        %644 = vmatprep.subr.mxu0 0.0
        %645 = vmatpush1.msra.mxu0 %v616
        %646 = vmatprep.subr.mxu0 0.0
        %647 = vmatpush1.msra.mxu0 %v617
        %648 = vmatprep.subr.mxu0 0.0
        %649 = vmatpush1.msra.mxu0 %v618
        %650 = vmatprep.subr.mxu0 0.0
        %651 = vmatpush1.msra.mxu0 %v619
        %652 = vmatprep.subr.mxu0 0.0
        %653 = vmatpush1.msra.mxu0 %v620
        %654 = vmatprep.subr.mxu0 0.0
        %655 = vmatpush1.msra.mxu0 %v621
        %656 = vmatprep.subr.mxu0 0.0
        %657 = vmatpush1.msra.mxu0 %v622
        %658 = vmatprep.subr.mxu0 0.0
        %659 = vmatpush1.msra.mxu0 %v623
        %660 = vmatprep.subr.mxu0 0.0
        %661 = vmatpush1.msra.mxu0 %v624
        %662 = vmatprep.subr.mxu0 0.0
        %663 = vmatpush1.msra.mxu0 %v625
        %664 = vmatprep.subr.mxu0 0.0
        %665 = vmatpush1.msra.mxu0 %v626
        %666 = vmatprep.subr.mxu0 0.0
        %667 = vmatpush1.msra.mxu0 0.0
        %668 = vmatprep.subr.mxu0 0.0
        %669 = vmatpush1.msra.mxu0 0.0
        %670 = vmatprep.subr.mxu0 0.0
        %671 = vmatpush1.msra.mxu0 0.0
        %672 = vmatprep.subr.mxu0 0.0
        %673 = vmatpush1.msra.mxu0 0.0
        %674 = vmatprep.subr.mxu0 0.0
        %675 = vmatpush1.msra.mxu0 0.0
        %676 = vmatprep.subr.mxu0 0.0
        %677 = vmatpush1.msra.mxu0 0.0
        %678 = vmatprep.subr.mxu0 0.0
        %679 = vmatpush1.msra.mxu0 0.0
        %680 = vmatprep.subr.mxu0 0.0
        %681 = vmatpush1.msra.mxu0 0.0
        %682 = vmatprep.subr.mxu0 0.0
        %683 = vmatpush1.msra.mxu0 0.0
        %684 = vmatprep.subr.mxu0 0.0
        %685 = vmatpush1.msra.mxu0 0.0
        %686 = vmatprep.subr.mxu0 0.0
        %687 = vmatpush1.msra.mxu0 0.0
        %688 = vmatprep.subr.mxu0 0.0
        %689 = vmatpush1.msra.mxu0 0.0
        %690 = vmatprep.subr.mxu0 0.0
        %691 = vmatpush1.msra.mxu0 0.0
        %692 = vmatprep.subr.mxu0 0.0
        %693 = vmatpush1.msra.mxu0 0.0
        %694 = vmatprep.subr.mxu0 0.0
        %695 = vmatpush1.msra.mxu0 0.0
        %696 = vmatprep.subr.mxu0 0.0
        %697 = vmatpush1.msra.mxu0 0.0
        %698 = vmatprep.mubr.f32.mxu0 0.0
        %699 = vmatmul.mubr.f32.gmra.mrb[0].mxu0 %v510
        %v700 = vpop.f32.mrb[0].mxu0
        %v701 = vadd.f32 %v632, %v700
        %v702 = vpop.f32.mrb[0].mxu0
        %703 = vmatprep.mubr.f32.mxu0 0.0
        %704 = vmatmul.mubr.f32.gmra.mrb[0].mxu0 %v511
        %v705 = vpop.f32.mrb[0].mxu0
        %v706 = vadd.f32 %v632, %v705
        %v707 = vpop.f32.mrb[0].mxu0
        %708 = vmatprep.mubr.f32.mxu0 0.0
        %709 = vmatmul.mubr.f32.gmra.mrb[0].mxu0 %v512
        %v710 = vpop.f32.mrb[0].mxu0
        %v711 = vadd.f32 %v632, %v710
        %v712 = vpop.f32.mrb[0].mxu0
        %713 = vmatprep.mubr.f32.mxu0 0.0
        %714 = vmatmul.mubr.f32.gmra.mrb[0].mxu0 %v513
        %v715 = vpop.f32.mrb[0].mxu0
        %v716 = vadd.f32 %v632, %v715
        %v717 = vpop.f32.mrb[0].mxu0
        %718 = vmatprep.mubr.f32.mxu0 0.0
        %719 = vmatmul.mubr.f32.gmra.mrb[0].mxu0 %v514
        %v720 = vpop.f32.mrb[0].mxu0
        %v721 = vadd.f32 %v632, %v720
        %v722 = vpop.f32.mrb[0].mxu0
        %723 = vmatprep.mubr.f32.mxu0 0.0
        %724 = vmatmul.mubr.f32.gmra.mrb[0].mxu0 %v515
        %v725 = vpop.f32.mrb[0].mxu0
        %v726 = vadd.f32 %v632, %v725
        %v727 = vpop.f32.mrb[0].mxu0
        %728 = vmatprep.mubr.f32.mxu0 0.0
        %729 = vmatmul.mubr.f32.gmra.mrb[0].mxu0 %v516
        %v730 = vpop.f32.mrb[0].mxu0
        %v731 = vadd.f32 %v632, %v730
        %v732 = vpop.f32.mrb[0].mxu0
        %733 = vmatprep.mubr.f32.mxu0 0.0
        %734 = vmatmul.mubr.f32.gmra.mrb[0].mxu0 %v517
        %v735 = vpop.f32.mrb[0].mxu0
        %v736 = vadd.f32 %v632, %v735
        %v737 = vpop.f32.mrb[0].mxu0
        %738 = vdwg.mxu0
        %v739 = vld [vmem:[#allocation8] sm:$0xff]
        %v740 = vld [vmem:[#allocation8 + $0x8] sm:$0xff]
        %v741 = vld [vmem:[#allocation8 + $0x10] sm:$0xff]
        %v742 = vld [vmem:[#allocation8 + $0x18] sm:$0xff]
        %v743 = vld [vmem:[#allocation8 + $0x20] sm:$0xff]
        %v744 = vld [vmem:[#allocation8 + $0x28] sm:$0xff]
        %v745 = vld [vmem:[#allocation8 + $0x30] sm:$0xff]
        %v746 = vld [vmem:[#allocation8 + $0x38] sm:$0xff]
        %v747 = vld [vmem:[#allocation8 + $0x40] sm:$0xff]
        %v748 = vld [vmem:[#allocation8 + $0x48] sm:$0xff]
        %v749 = vld [vmem:[#allocation8 + $0x50] sm:$0xff]
        %v750 = vld [vmem:[#allocation8 + $0x58] sm:$0xff]
        %v751 = vld [vmem:[#allocation8 + $0x60] sm:$0xff]
        %v752 = vld [vmem:[#allocation8 + $0x68] sm:$0xff]
        %v753 = vld [vmem:[#allocation8 + $0x70] sm:$0xff]
        %v754 = vld [vmem:[#allocation8 + $0x78] sm:$0xff]
        %v755 = vld [vmem:[%s7] sm:$0x1]
        %v757 = vlaneseq
        %v758 = vshrl.u32 %v757, 7
        %v759 = vsub.s32 0, %v758
        %v760 = vrot.slane %v755, %v759
        %762 = vmatprep.subr.mxu0 0.0
        %763 = vmatpush1.msra.mxu0 %v739
        %764 = vmatprep.subr.mxu0 0.0
        %765 = vmatpush1.msra.mxu0 %v740
        %766 = vmatprep.subr.mxu0 0.0
        %767 = vmatpush1.msra.mxu0 %v741
        %768 = vmatprep.subr.mxu0 0.0
        %769 = vmatpush1.msra.mxu0 %v742
        %770 = vmatprep.subr.mxu0 0.0
        %771 = vmatpush1.msra.mxu0 %v743
        %772 = vmatprep.subr.mxu0 0.0
        %773 = vmatpush1.msra.mxu0 %v744
        %774 = vmatprep.subr.mxu0 0.0
        %775 = vmatpush1.msra.mxu0 %v745
        %776 = vmatprep.subr.mxu0 0.0
        %777 = vmatpush1.msra.mxu0 %v746
        %778 = vmatprep.subr.mxu0 0.0
        %779 = vmatpush1.msra.mxu0 %v747
        %780 = vmatprep.subr.mxu0 0.0
        %781 = vmatpush1.msra.mxu0 %v748
        %782 = vmatprep.subr.mxu0 0.0
        %783 = vmatpush1.msra.mxu0 %v749
        %784 = vmatprep.subr.mxu0 0.0
        %785 = vmatpush1.msra.mxu0 %v750
        %786 = vmatprep.subr.mxu0 0.0
        %787 = vmatpush1.msra.mxu0 %v751
        %788 = vmatprep.subr.mxu0 0.0
        %789 = vmatpush1.msra.mxu0 %v752
        %790 = vmatprep.subr.mxu0 0.0
        %791 = vmatpush1.msra.mxu0 %v753
        %792 = vmatprep.subr.mxu0 0.0
        %793 = vmatpush1.msra.mxu0 %v754
        %794 = vmatprep.subr.mxu0 0.0
        %795 = vmatpush1.msra.mxu0 0.0
        %796 = vmatprep.subr.mxu0 0.0
        %797 = vmatpush1.msra.mxu0 0.0
        %798 = vmatprep.subr.mxu0 0.0
        %799 = vmatpush1.msra.mxu0 0.0
        %800 = vmatprep.subr.mxu0 0.0
        %801 = vmatpush1.msra.mxu0 0.0
        %802 = vmatprep.subr.mxu0 0.0
        %803 = vmatpush1.msra.mxu0 0.0
        %804 = vmatprep.subr.mxu0 0.0
        %805 = vmatpush1.msra.mxu0 0.0
        %806 = vmatprep.subr.mxu0 0.0
        %807 = vmatpush1.msra.mxu0 0.0
        %808 = vmatprep.subr.mxu0 0.0
        %809 = vmatpush1.msra.mxu0 0.0
        %810 = vmatprep.subr.mxu0 0.0
        %811 = vmatpush1.msra.mxu0 0.0
        %812 = vmatprep.subr.mxu0 0.0
        %813 = vmatpush1.msra.mxu0 0.0
        %814 = vmatprep.subr.mxu0 0.0
        %815 = vmatpush1.msra.mxu0 0.0
        %816 = vmatprep.subr.mxu0 0.0
        %817 = vmatpush1.msra.mxu0 0.0
        %818 = vmatprep.subr.mxu0 0.0
        %819 = vmatpush1.msra.mxu0 0.0
        %820 = vmatprep.subr.mxu0 0.0
        %821 = vmatpush1.msra.mxu0 0.0
        %822 = vmatprep.subr.mxu0 0.0
        %823 = vmatpush1.msra.mxu0 0.0
        %824 = vmatprep.subr.mxu0 0.0
        %825 = vmatpush1.msra.mxu0 0.0
        %826 = vmatprep.mubr.f32.mxu0 0.0
        %827 = vmatmul.mubr.f32.gmra.mrb[0].mxu0 %v510
        %v828 = vpop.f32.mrb[0].mxu0
        %v829 = vadd.f32 %v760, %v828
        %v830 = vpop.f32.mrb[0].mxu0
        %831 = vmatprep.mubr.f32.mxu0 0.0
        %832 = vmatmul.mubr.f32.gmra.mrb[0].mxu0 %v511
        %v833 = vpop.f32.mrb[0].mxu0
        %v834 = vadd.f32 %v760, %v833
        %v835 = vpop.f32.mrb[0].mxu0
        %836 = vmatprep.mubr.f32.mxu0 0.0
        %837 = vmatmul.mubr.f32.gmra.mrb[0].mxu0 %v512
        %v838 = vpop.f32.mrb[0].mxu0
        %v839 = vadd.f32 %v760, %v838
        %v840 = vpop.f32.mrb[0].mxu0
        %841 = vmatprep.mubr.f32.mxu0 0.0
        %842 = vmatmul.mubr.f32.gmra.mrb[0].mxu0 %v513
        %v843 = vpop.f32.mrb[0].mxu0
        %v844 = vadd.f32 %v760, %v843
        %v845 = vpop.f32.mrb[0].mxu0
        %846 = vmatprep.mubr.f32.mxu0 0.0
        %847 = vmatmul.mubr.f32.gmra.mrb[0].mxu0 %v514
        %v848 = vpop.f32.mrb[0].mxu0
        %v849 = vadd.f32 %v760, %v848
        %v850 = vpop.f32.mrb[0].mxu0
        %851 = vmatprep.mubr.f32.mxu0 0.0
        %852 = vmatmul.mubr.f32.gmra.mrb[0].mxu0 %v515
        %v853 = vpop.f32.mrb[0].mxu0
        %v854 = vadd.f32 %v760, %v853
        %v855 = vpop.f32.mrb[0].mxu0
        %856 = vmatprep.mubr.f32.mxu0 0.0
        %857 = vmatmul.mubr.f32.gmra.mrb[0].mxu0 %v516
        %v858 = vpop.f32.mrb[0].mxu0
        %v859 = vadd.f32 %v760, %v858
        %v860 = vpop.f32.mrb[0].mxu0
        %861 = vmatprep.mubr.f32.mxu0 0.0
        %862 = vmatmul.mubr.f32.gmra.mrb[0].mxu0 %v517
        %v863 = vpop.f32.mrb[0].mxu0
        %v864 = vadd.f32 %v760, %v863
        %v865 = vpop.f32.mrb[0].mxu0
        %866 = vdwg.mxu0
        %v868 = vcombine.high %v608, %v608
        %v870 = vunpack.c.l.s4 1966171168
        %v871 = vunpack.c.0.s8 %v870
        %v872 = vlaneseq
        %v873 = vshrl.u32 %v872, 7
        %v874 = vsub.s32 %v871, %v873
        %v875 = vrot.slane %v608, %v874
        %v877 = vunpack.c.l.s4 1966171168
        %v878 = vunpack.c.0.s8 %v877
        %v879 = vlaneseq
        %v880 = vshrl.u32 %v879, 7
        %v881 = vsub.s32 %v878, %v880
        %v882 = vrot.slane %v868, %v881
        %v883 = vcombine.high %v875, %v875
        %v884 = vcombine.high %v882, %v882
        %v886 = vunpack.c.l.s4 1966171168
        %v887 = vunpack.c.0.s8 %v886
        %v888 = vlaneseq
        %v889 = vshrl.u32 %v888, 7
        %v890 = vsub.s32 %v887, %v889
        %v891 = vrot.slane %v875, %v890
        %v893 = vunpack.c.l.s4 1966171168
        %v894 = vunpack.c.0.s8 %v893
        %v895 = vlaneseq
        %v896 = vshrl.u32 %v895, 7
        %v897 = vsub.s32 %v894, %v896
        %v898 = vrot.slane %v882, %v897
        %v900 = vunpack.c.l.s4 1966171168
        %v901 = vunpack.c.0.s8 %v900
        %v902 = vlaneseq
        %v903 = vshrl.u32 %v902, 7
        %v904 = vsub.s32 %v901, %v903
        %v905 = vrot.slane %v883, %v904
        %v907 = vunpack.c.l.s4 1966171168
        %v908 = vunpack.c.0.s8 %v907
        %v909 = vlaneseq
        %v910 = vshrl.u32 %v909, 7
        %v911 = vsub.s32 %v908, %v910
        %v912 = vrot.slane %v884, %v911
        %v913 = vcombine.high %v891, %v891
        %v914 = vcombine.high %v898, %v898
        %v915 = vcombine.high %v905, %v905
        %v916 = vcombine.high %v912, %v912
        %v917 = vlaneseq
        %v918 = vshrl.u32 %v917, 7
        %v919 = vsub.s32 0, %v918
        %v920 = vrot.slane %v891, %v919
        %v921 = vlaneseq
        %v922 = vshrl.u32 %v921, 7
        %v923 = vsub.s32 0, %v922
        %v924 = vrot.slane %v905, %v923
        %v925 = vlaneseq
        %v926 = vshrl.u32 %v925, 7
        %v927 = vsub.s32 0, %v926
        %v928 = vrot.slane %v913, %v927
        %v929 = vlaneseq
        %v930 = vshrl.u32 %v929, 7
        %v931 = vsub.s32 0, %v930
        %v932 = vrot.slane %v915, %v931
        %v933 = vlaneseq
        %v934 = vshrl.u32 %v933, 7
        %v935 = vsub.s32 0, %v934
        %v936 = vrot.slane %v898, %v935
        %v937 = vlaneseq
        %v938 = vshrl.u32 %v937, 7
        %v939 = vsub.s32 0, %v938
        %v940 = vrot.slane %v912, %v939
        %v941 = vlaneseq
        %v942 = vshrl.u32 %v941, 7
        %v943 = vsub.s32 0, %v942
        %v944 = vrot.slane %v914, %v943
        %v945 = vlaneseq
        %v946 = vshrl.u32 %v945, 7
        %v947 = vsub.s32 0, %v946
        %v948 = vrot.slane %v916, %v947
        %v957 = vmul.f32 %v701, %v920
        %v958 = vmul.f32 %v706, %v924
        %v959 = vmul.f32 %v711, %v928
        %v960 = vmul.f32 %v716, %v932
        %v961 = vmul.f32 %v721, %v936
        %v962 = vmul.f32 %v726, %v940
        %v963 = vmul.f32 %v731, %v944
        %v964 = vmul.f32 %v736, %v948
        %v965 = vld [vmem:[%s10] sm:$0xff]
        %v966 = vld [vmem:[%s10 + $0x8] sm:$0xff]
        %v967 = vld [vmem:[%s10 + $0x10] sm:$0xff]
        %v968 = vld [vmem:[%s10 + $0x18] sm:$0xff]
        %v969 = vld [vmem:[%s10 + $0x20] sm:$0xff]
        %v970 = vld [vmem:[%s10 + $0x28] sm:$0xff]
        %v971 = vld [vmem:[%s10 + $0x30] sm:$0xff]
        %v972 = vld [vmem:[%s10 + $0x38] sm:$0xff]
        %v973 = vld [vmem:[%s10 + $0x40] sm:$0xff]
        %v974 = vld [vmem:[%s10 + $0x48] sm:$0xff]
        %v975 = vld [vmem:[%s10 + $0x50] sm:$0xff]
        %v976 = vld [vmem:[%s10 + $0x58] sm:$0xff]
        %v977 = vld [vmem:[%s10 + $0x60] sm:$0xff]
        %v978 = vld [vmem:[%s10 + $0x68] sm:$0xff]
        %v979 = vld [vmem:[%s10 + $0x70] sm:$0xff]
        %v980 = vld [vmem:[%s10 + $0x78] sm:$0xff]
        %981 = vmatprep.subr.mxu0 0.0
        %982 = vmatpush1.msra.mxu0 %v965
        %983 = vmatprep.subr.mxu0 0.0
        %984 = vmatpush1.msra.mxu0 %v966
        %985 = vmatprep.subr.mxu0 0.0
        %986 = vmatpush1.msra.mxu0 %v967
        %987 = vmatprep.subr.mxu0 0.0
        %988 = vmatpush1.msra.mxu0 %v968
        %989 = vmatprep.subr.mxu0 0.0
        %990 = vmatpush1.msra.mxu0 %v969
        %991 = vmatprep.subr.mxu0 0.0
        %992 = vmatpush1.msra.mxu0 %v970
        %993 = vmatprep.subr.mxu0 0.0
        %994 = vmatpush1.msra.mxu0 %v971
        %995 = vmatprep.subr.mxu0 0.0
        %996 = vmatpush1.msra.mxu0 %v972
        %997 = vmatprep.subr.mxu0 0.0
        %998 = vmatpush1.msra.mxu0 %v973
        %999 = vmatprep.subr.mxu0 0.0
        %1000 = vmatpush1.msra.mxu0 %v974
        %1001 = vmatprep.subr.mxu0 0.0
        %1002 = vmatpush1.msra.mxu0 %v975
        %1003 = vmatprep.subr.mxu0 0.0
        %1004 = vmatpush1.msra.mxu0 %v976
        %1005 = vmatprep.subr.mxu0 0.0
        %1006 = vmatpush1.msra.mxu0 %v977
        %1007 = vmatprep.subr.mxu0 0.0
        %1008 = vmatpush1.msra.mxu0 %v978
        %1009 = vmatprep.subr.mxu0 0.0
        %1010 = vmatpush1.msra.mxu0 %v979
        %1011 = vmatprep.subr.mxu0 0.0
        %1012 = vmatpush1.msra.mxu0 %v980
        %1013 = vmatprep.subr.mxu0 0.0
        %1014 = vmatpush1.msra.mxu0 0.0
        %1015 = vmatprep.subr.mxu0 0.0
        %1016 = vmatpush1.msra.mxu0 0.0
        %1017 = vmatprep.subr.mxu0 0.0
        %1018 = vmatpush1.msra.mxu0 0.0
        %1019 = vmatprep.subr.mxu0 0.0
        %1020 = vmatpush1.msra.mxu0 0.0
        %1021 = vmatprep.subr.mxu0 0.0
        %1022 = vmatpush1.msra.mxu0 0.0
        %1023 = vmatprep.subr.mxu0 0.0
        %1024 = vmatpush1.msra.mxu0 0.0
        %1025 = vmatprep.subr.mxu0 0.0
        %1026 = vmatpush1.msra.mxu0 0.0
        %1027 = vmatprep.subr.mxu0 0.0
        %1028 = vmatpush1.msra.mxu0 0.0
        %1029 = vmatprep.subr.mxu0 0.0
        %1030 = vmatpush1.msra.mxu0 0.0
        %1031 = vmatprep.subr.mxu0 0.0
        %1032 = vmatpush1.msra.mxu0 0.0
        %1033 = vmatprep.subr.mxu0 0.0
        %1034 = vmatpush1.msra.mxu0 0.0
        %1035 = vmatprep.subr.mxu0 0.0
        %1036 = vmatpush1.msra.mxu0 0.0
        %1037 = vmatprep.subr.mxu0 0.0
        %1038 = vmatpush1.msra.mxu0 0.0
        %1039 = vmatprep.subr.mxu0 0.0
        %1040 = vmatpush1.msra.mxu0 0.0
        %1041 = vmatprep.subr.mxu0 0.0
        %1042 = vmatpush1.msra.mxu0 0.0
        %1043 = vmatprep.subr.mxu0 0.0
        %1044 = vmatpush1.msra.mxu0 0.0
        %1045 = vmatprep.mubr.f32.mxu0 0.0
        %1046 = vmatmul.mubr.f32.gmra.mrb[0].mxu0 %v957
        %v1047 = vpop.f32.mrb[0].mxu0
        %v1048 = vadd.f32 0.0, %v1047
        %v1049 = vpop.f32.mrb[0].mxu0
        %1050 = vmatprep.mubr.f32.mxu0 0.0
        %1051 = vmatmul.mubr.f32.gmra.mrb[0].mxu0 %v958
        %v1052 = vpop.f32.mrb[0].mxu0
        %v1053 = vadd.f32 0.0, %v1052
        %v1054 = vpop.f32.mrb[0].mxu0
        %1055 = vmatprep.mubr.f32.mxu0 0.0
        %1056 = vmatmul.mubr.f32.gmra.mrb[0].mxu0 %v959
        %v1057 = vpop.f32.mrb[0].mxu0
        %v1058 = vadd.f32 0.0, %v1057
        %v1059 = vpop.f32.mrb[0].mxu0
        %1060 = vmatprep.mubr.f32.mxu0 0.0
        %1061 = vmatmul.mubr.f32.gmra.mrb[0].mxu0 %v960
        %v1062 = vpop.f32.mrb[0].mxu0
        %v1063 = vadd.f32 0.0, %v1062
        %v1064 = vpop.f32.mrb[0].mxu0
        %1065 = vmatprep.mubr.f32.mxu0 0.0
        %1066 = vmatmul.mubr.f32.gmra.mrb[0].mxu0 %v961
        %v1067 = vpop.f32.mrb[0].mxu0
        %v1068 = vadd.f32 0.0, %v1067
        %v1069 = vpop.f32.mrb[0].mxu0
        %1070 = vmatprep.mubr.f32.mxu0 0.0
        %1071 = vmatmul.mubr.f32.gmra.mrb[0].mxu0 %v962
        %v1072 = vpop.f32.mrb[0].mxu0
        %v1073 = vadd.f32 0.0, %v1072
        %v1074 = vpop.f32.mrb[0].mxu0
        %1075 = vmatprep.mubr.f32.mxu0 0.0
        %1076 = vmatmul.mubr.f32.gmra.mrb[0].mxu0 %v963
        %v1077 = vpop.f32.mrb[0].mxu0
        %v1078 = vadd.f32 0.0, %v1077
        %v1079 = vpop.f32.mrb[0].mxu0
        %1080 = vmatprep.mubr.f32.mxu0 0.0
        %1081 = vmatmul.mubr.f32.gmra.mrb[0].mxu0 %v964
        %v1082 = vpop.f32.mrb[0].mxu0
        %v1083 = vadd.f32 0.0, %v1082
        %v1084 = vpop.f32.mrb[0].mxu0
        %1085 = vdwg.mxu0
        %vm1086 = vcmask 31744
        %v1087 = vsel %vm1086, %v1048, -inf
        %v1088 = vrot.slane %v1087, 4
        %v1089 = vmax.f32 %v1087, %v1088
        %v1090 = vrot.slane %v1089, 2
        %v1091 = vmax.f32 %v1089, %v1090
        %v1092 = vrot.slane %v1091, 1
        %v1093 = vmax.f32 %v1091, %v1092
        %v1094 = vsel %vm1086, %v1053, -inf
        %v1095 = vrot.slane %v1094, 4
        %v1096 = vmax.f32 %v1094, %v1095
        %v1097 = vrot.slane %v1096, 2
        %v1098 = vmax.f32 %v1096, %v1097
        %v1099 = vrot.slane %v1098, 1
        %v1100 = vmax.f32 %v1098, %v1099
        %v1101 = vsel %vm1086, %v1058, -inf
        %v1102 = vrot.slane %v1101, 4
        %v1103 = vmax.f32 %v1101, %v1102
        %v1104 = vrot.slane %v1103, 2
        %v1105 = vmax.f32 %v1103, %v1104
        %v1106 = vrot.slane %v1105, 1
        %v1107 = vmax.f32 %v1105, %v1106
        %v1108 = vsel %vm1086, %v1063, -inf
        %v1109 = vrot.slane %v1108, 4
        %v1110 = vmax.f32 %v1108, %v1109
        %v1111 = vrot.slane %v1110, 2
        %v1112 = vmax.f32 %v1110, %v1111
        %v1113 = vrot.slane %v1112, 1
        %v1114 = vmax.f32 %v1112, %v1113
        %v1115 = vsel %vm1086, %v1068, -inf
        %v1116 = vrot.slane %v1115, 4
        %v1117 = vmax.f32 %v1115, %v1116
        %v1118 = vrot.slane %v1117, 2
        %v1119 = vmax.f32 %v1117, %v1118
        %v1120 = vrot.slane %v1119, 1
        %v1121 = vmax.f32 %v1119, %v1120
        %v1122 = vsel %vm1086, %v1073, -inf
        %v1123 = vrot.slane %v1122, 4
        %v1124 = vmax.f32 %v1122, %v1123
        %v1125 = vrot.slane %v1124, 2
        %v1126 = vmax.f32 %v1124, %v1125
        %v1127 = vrot.slane %v1126, 1
        %v1128 = vmax.f32 %v1126, %v1127
        %v1129 = vsel %vm1086, %v1078, -inf
        %v1130 = vrot.slane %v1129, 4
        %v1131 = vmax.f32 %v1129, %v1130
        %v1132 = vrot.slane %v1131, 2
        %v1133 = vmax.f32 %v1131, %v1132
        %v1134 = vrot.slane %v1133, 1
        %v1135 = vmax.f32 %v1133, %v1134
        %v1136 = vsel %vm1086, %v1083, -inf
        %v1137 = vrot.slane %v1136, 4
        %v1138 = vmax.f32 %v1136, %v1137
        %v1139 = vrot.slane %v1138, 2
        %v1140 = vmax.f32 %v1138, %v1139
        %v1141 = vrot.slane %v1140, 1
        %v1142 = vmax.f32 %v1140, %v1141
        %v1143 = vsub.f32 %v1048, %v1093
        %v1144 = vsub.f32 %v1053, %v1100
        %v1145 = vsub.f32 %v1058, %v1107
        %v1146 = vsub.f32 %v1063, %v1114
        %v1147 = vsub.f32 %v1068, %v1121
        %v1148 = vsub.f32 %v1073, %v1128
        %v1149 = vsub.f32 %v1078, %v1135
        %v1150 = vsub.f32 %v1083, %v1142
        %v1151 = vmul.f32 %v1143, 1.442695
        %v1152 = vpow.pop %v1151
        %v1153 = vmul.f32 %v1144, 1.442695
        %v1154 = vpow.pop %v1153
        %v1155 = vmul.f32 %v1145, 1.442695
        %v1156 = vpow.pop %v1155
        %v1157 = vmul.f32 %v1146, 1.442695
        %v1158 = vpow.pop %v1157
        %v1159 = vmul.f32 %v1147, 1.442695
        %v1160 = vpow.pop %v1159
        %v1161 = vmul.f32 %v1148, 1.442695
        %v1162 = vpow.pop %v1161
        %v1163 = vmul.f32 %v1149, 1.442695
        %v1164 = vpow.pop %v1163
        %v1165 = vmul.f32 %v1150, 1.442695
        %v1166 = vpow.pop %v1165
        %v1167 = vsel %vm1086, %v1152, 0.0
        %v1168 = vrot.slane %v1167, 4
        %v1169 = vadd.f32 %v1167, %v1168
        %v1170 = vrot.slane %v1169, 2
        %v1171 = vadd.f32 %v1169, %v1170
        %v1172 = vrot.slane %v1171, 1
        %v1173 = vadd.f32 %v1171, %v1172
        %v1174 = vsel %vm1086, %v1154, 0.0
        %v1175 = vrot.slane %v1174, 4
        %v1176 = vadd.f32 %v1174, %v1175
        %v1177 = vrot.slane %v1176, 2
        %v1178 = vadd.f32 %v1176, %v1177
        %v1179 = vrot.slane %v1178, 1
        %v1180 = vadd.f32 %v1178, %v1179
        %v1181 = vsel %vm1086, %v1156, 0.0
        %v1182 = vrot.slane %v1181, 4
        %v1183 = vadd.f32 %v1181, %v1182
        %v1184 = vrot.slane %v1183, 2
        %v1185 = vadd.f32 %v1183, %v1184
        %v1186 = vrot.slane %v1185, 1
        %v1187 = vadd.f32 %v1185, %v1186
        %v1188 = vsel %vm1086, %v1158, 0.0
        %v1189 = vrot.slane %v1188, 4
        %v1190 = vadd.f32 %v1188, %v1189
        %v1191 = vrot.slane %v1190, 2
        %v1192 = vadd.f32 %v1190, %v1191
        %v1193 = vrot.slane %v1192, 1
        %v1194 = vadd.f32 %v1192, %v1193
        %v1195 = vsel %vm1086, %v1160, 0.0
        %v1196 = vrot.slane %v1195, 4
        %v1197 = vadd.f32 %v1195, %v1196
        %v1198 = vrot.slane %v1197, 2
        %v1199 = vadd.f32 %v1197, %v1198
        %v1200 = vrot.slane %v1199, 1
        %v1201 = vadd.f32 %v1199, %v1200
        %v1202 = vsel %vm1086, %v1162, 0.0
        %v1203 = vrot.slane %v1202, 4
        %v1204 = vadd.f32 %v1202, %v1203
        %v1205 = vrot.slane %v1204, 2
        %v1206 = vadd.f32 %v1204, %v1205
        %v1207 = vrot.slane %v1206, 1
        %v1208 = vadd.f32 %v1206, %v1207
        %v1209 = vsel %vm1086, %v1164, 0.0
        %v1210 = vrot.slane %v1209, 4
        %v1211 = vadd.f32 %v1209, %v1210
        %v1212 = vrot.slane %v1211, 2
        %v1213 = vadd.f32 %v1211, %v1212
        %v1214 = vrot.slane %v1213, 1
        %v1215 = vadd.f32 %v1213, %v1214
        %v1216 = vsel %vm1086, %v1166, 0.0
        %v1217 = vrot.slane %v1216, 4
        %v1218 = vadd.f32 %v1216, %v1217
        %v1219 = vrot.slane %v1218, 2
        %v1220 = vadd.f32 %v1218, %v1219
        %v1221 = vrot.slane %v1220, 1
        %v1222 = vadd.f32 %v1220, %v1221
        %v1223 = vrcp.pop %v1173
        %v1224 = vmul.f32 %v1152, %v1223
        %v1225 = vrcp.pop %v1180
        %v1226 = vmul.f32 %v1154, %v1225
        %v1227 = vrcp.pop %v1187
        %v1228 = vmul.f32 %v1156, %v1227
        %v1229 = vrcp.pop %v1194
        %v1230 = vmul.f32 %v1158, %v1229
        %v1231 = vrcp.pop %v1201
        %v1232 = vmul.f32 %v1160, %v1231
        %v1233 = vrcp.pop %v1208
        %v1234 = vmul.f32 %v1162, %v1233
        %v1235 = vrcp.pop %v1215
        %v1236 = vmul.f32 %v1164, %v1235
        %v1237 = vrcp.pop %v1222
        %v1238 = vmul.f32 %v1166, %v1237
        %v1239 = vld [vmem:[%s11] sm:$0xf]
        %v1241 = vsel %vm1086, %v1224, 0
        %v1244 = vsel %vm1086, %v1226, 0
        %v1247 = vsel %vm1086, %v1228, 0
        %v1250 = vsel %vm1086, %v1230, 0
        %v1253 = vsel %vm1086, %v1232, 0
        %v1256 = vsel %vm1086, %v1234, 0
        %v1259 = vsel %vm1086, %v1236, 0
        %v1262 = vsel %vm1086, %v1238, 0
        %vm1264 = vcmask 1043456
        %v1266 = vsel %vm1264, %v1239, 0
        %1268 = vmatprep.subr.mxu0 0.0
        %1269 = vmatpush1.msra.mxu0 %v1266
        %1270 = vmatprep.subr.mxu0 0.0
        %1271 = vmatpush1.msra.mxu0 0.0
        %1272 = vmatprep.subr.mxu0 0.0
        %1273 = vmatpush1.msra.mxu0 0.0
        %1274 = vmatprep.subr.mxu0 0.0
        %1275 = vmatpush1.msra.mxu0 0.0
        %1276 = vmatprep.subr.mxu0 0.0
        %1277 = vmatpush1.msra.mxu0 0.0
        %1278 = vmatprep.subr.mxu0 0.0
        %1279 = vmatpush1.msra.mxu0 0.0
        %1280 = vmatprep.subr.mxu0 0.0
        %1281 = vmatpush1.msra.mxu0 0.0
        %1282 = vmatprep.subr.mxu0 0.0
        %1283 = vmatpush1.msra.mxu0 0.0
        %1284 = vmatprep.subr.mxu0 0.0
        %1285 = vmatpush1.msra.mxu0 0.0
        %1286 = vmatprep.subr.mxu0 0.0
        %1287 = vmatpush1.msra.mxu0 0.0
        %1288 = vmatprep.subr.mxu0 0.0
        %1289 = vmatpush1.msra.mxu0 0.0
        %1290 = vmatprep.subr.mxu0 0.0
        %1291 = vmatpush1.msra.mxu0 0.0
        %1292 = vmatprep.subr.mxu0 0.0
        %1293 = vmatpush1.msra.mxu0 0.0
        %1294 = vmatprep.subr.mxu0 0.0
        %1295 = vmatpush1.msra.mxu0 0.0
        %1296 = vmatprep.subr.mxu0 0.0
        %1297 = vmatpush1.msra.mxu0 0.0
        %1298 = vmatprep.subr.mxu0 0.0
        %1299 = vmatpush1.msra.mxu0 0.0
        %1300 = vmatprep.subr.mxu0 0.0
        %1301 = vmatpush1.msra.mxu0 0.0
        %1302 = vmatprep.subr.mxu0 0.0
        %1303 = vmatpush1.msra.mxu0 0.0
        %1304 = vmatprep.subr.mxu0 0.0
        %1305 = vmatpush1.msra.mxu0 0.0
        %1306 = vmatprep.subr.mxu0 0.0
        %1307 = vmatpush1.msra.mxu0 0.0
        %1308 = vmatprep.subr.mxu0 0.0
        %1309 = vmatpush1.msra.mxu0 0.0
        %1310 = vmatprep.subr.mxu0 0.0
        %1311 = vmatpush1.msra.mxu0 0.0
        %1312 = vmatprep.subr.mxu0 0.0
        %1313 = vmatpush1.msra.mxu0 0.0
        %1314 = vmatprep.subr.mxu0 0.0
        %1315 = vmatpush1.msra.mxu0 0.0
        %1316 = vmatprep.subr.mxu0 0.0
        %1317 = vmatpush1.msra.mxu0 0.0
        %1318 = vmatprep.subr.mxu0 0.0
        %1319 = vmatpush1.msra.mxu0 0.0
        %1320 = vmatprep.subr.mxu0 0.0
        %1321 = vmatpush1.msra.mxu0 0.0
        %1322 = vmatprep.subr.mxu0 0.0
        %1323 = vmatpush1.msra.mxu0 0.0
        %1324 = vmatprep.subr.mxu0 0.0
        %1325 = vmatpush1.msra.mxu0 0.0
        %1326 = vmatprep.subr.mxu0 0.0
        %1327 = vmatpush1.msra.mxu0 0.0
        %1328 = vmatprep.subr.mxu0 0.0
        %1329 = vmatpush1.msra.mxu0 0.0
        %1330 = vmatprep.subr.mxu0 0.0
        %1331 = vmatpush1.msra.mxu0 0.0
        %1332 = vmatprep.mubr.f32.mxu0 0.0
        %1333 = vmatmul.mubr.f32.gmra.mrb[0].mxu0 %v1241
        %v1334 = vpop.f32.mrb[0].mxu0
        %v1335 = vadd.f32 0.0, %v1334
        %v1336 = vpop.f32.mrb[0].mxu0
        %1337 = vmatprep.mubr.f32.mxu0 0.0
        %1338 = vmatmul.mubr.f32.gmra.mrb[0].mxu0 %v1244
        %v1339 = vpop.f32.mrb[0].mxu0
        %v1340 = vadd.f32 0.0, %v1339
        %v1341 = vpop.f32.mrb[0].mxu0
        %1342 = vmatprep.mubr.f32.mxu0 0.0
        %1343 = vmatmul.mubr.f32.gmra.mrb[0].mxu0 %v1247
        %v1344 = vpop.f32.mrb[0].mxu0
        %v1345 = vadd.f32 0.0, %v1344
        %v1346 = vpop.f32.mrb[0].mxu0
        %1347 = vmatprep.mubr.f32.mxu0 0.0
        %1348 = vmatmul.mubr.f32.gmra.mrb[0].mxu0 %v1250
        %v1349 = vpop.f32.mrb[0].mxu0
        %v1350 = vadd.f32 0.0, %v1349
        %v1351 = vpop.f32.mrb[0].mxu0
        %1352 = vmatprep.mubr.f32.mxu0 0.0
        %1353 = vmatmul.mubr.f32.gmra.mrb[0].mxu0 %v1253
        %v1354 = vpop.f32.mrb[0].mxu0
        %v1355 = vadd.f32 0.0, %v1354
        %v1356 = vpop.f32.mrb[0].mxu0
        %1357 = vmatprep.mubr.f32.mxu0 0.0
        %1358 = vmatmul.mubr.f32.gmra.mrb[0].mxu0 %v1256
        %v1359 = vpop.f32.mrb[0].mxu0
        %v1360 = vadd.f32 0.0, %v1359
        %v1361 = vpop.f32.mrb[0].mxu0
        %1362 = vmatprep.mubr.f32.mxu0 0.0
        %1363 = vmatmul.mubr.f32.gmra.mrb[0].mxu0 %v1259
        %v1364 = vpop.f32.mrb[0].mxu0
        %v1365 = vadd.f32 0.0, %v1364
        %v1366 = vpop.f32.mrb[0].mxu0
        %1367 = vmatprep.mubr.f32.mxu0 0.0
        %1368 = vmatmul.mubr.f32.gmra.mrb[0].mxu0 %v1262
        %v1369 = vpop.f32.mrb[0].mxu0
        %v1370 = vadd.f32 0.0, %v1369
        %v1371 = vpop.f32.mrb[0].mxu0
        %1372 = vdwg.mxu0
        %v1373 = vmul.f32 %v1335, %v829
        %v1374 = vmul.f32 %v1340, %v834
        %v1375 = vmul.f32 %v1345, %v839
        %v1376 = vmul.f32 %v1350, %v844
        %v1377 = vmul.f32 %v1355, %v849
        %v1378 = vmul.f32 %v1360, %v854
        %v1379 = vmul.f32 %v1365, %v859
        %v1380 = vmul.f32 %v1370, %v864
        %v1381 = vrot.slane %v1373, 4
        %v1382 = vadd.f32 %v1373, %v1381
        %v1383 = vrot.slane %v1382, 2
        %v1384 = vadd.f32 %v1382, %v1383
        %v1385 = vrot.slane %v1384, 1
        %v1386 = vadd.f32 %v1384, %v1385
        %v1387 = vrot.slane %v1374, 4
        %v1388 = vadd.f32 %v1374, %v1387
        %v1389 = vrot.slane %v1388, 2
        %v1390 = vadd.f32 %v1388, %v1389
        %v1391 = vrot.slane %v1390, 1
        %v1392 = vadd.f32 %v1390, %v1391
        %v1393 = vrot.slane %v1375, 4
        %v1394 = vadd.f32 %v1375, %v1393
        %v1395 = vrot.slane %v1394, 2
        %v1396 = vadd.f32 %v1394, %v1395
        %v1397 = vrot.slane %v1396, 1
        %v1398 = vadd.f32 %v1396, %v1397
        %v1399 = vrot.slane %v1376, 4
        %v1400 = vadd.f32 %v1376, %v1399
        %v1401 = vrot.slane %v1400, 2
        %v1402 = vadd.f32 %v1400, %v1401
        %v1403 = vrot.slane %v1402, 1
        %v1404 = vadd.f32 %v1402, %v1403
        %v1405 = vrot.slane %v1377, 4
        %v1406 = vadd.f32 %v1377, %v1405
        %v1407 = vrot.slane %v1406, 2
        %v1408 = vadd.f32 %v1406, %v1407
        %v1409 = vrot.slane %v1408, 1
        %v1410 = vadd.f32 %v1408, %v1409
        %v1411 = vrot.slane %v1378, 4
        %v1412 = vadd.f32 %v1378, %v1411
        %v1413 = vrot.slane %v1412, 2
        %v1414 = vadd.f32 %v1412, %v1413
        %v1415 = vrot.slane %v1414, 1
        %v1416 = vadd.f32 %v1414, %v1415
        %v1417 = vrot.slane %v1379, 4
        %v1418 = vadd.f32 %v1379, %v1417
        %v1419 = vrot.slane %v1418, 2
        %v1420 = vadd.f32 %v1418, %v1419
        %v1421 = vrot.slane %v1420, 1
        %v1422 = vadd.f32 %v1420, %v1421
        %v1423 = vrot.slane %v1380, 4
        %v1424 = vadd.f32 %v1380, %v1423
        %v1425 = vrot.slane %v1424, 2
        %v1426 = vadd.f32 %v1424, %v1425
        %v1427 = vrot.slane %v1426, 1
        %v1428 = vadd.f32 %v1426, %v1427
        %v1429 = vld [vmem:[#allocation10] sm:$0xff]
        %v1430 = vld [vmem:[#allocation10 + $0x8] sm:$0xff]
        %v1431 = vld [vmem:[#allocation10 + $0x10] sm:$0xff]
        %v1432 = vld [vmem:[#allocation10 + $0x18] sm:$0xff]
        %v1433 = vld [vmem:[#allocation10 + $0x20] sm:$0xff]
        %v1434 = vld [vmem:[#allocation10 + $0x28] sm:$0xff]
        %v1435 = vld [vmem:[#allocation10 + $0x30] sm:$0xff]
        %v1436 = vld [vmem:[#allocation10 + $0x38] sm:$0xff]
        %v1437 = vld [vmem:[#allocation10 + $0x40] sm:$0xff]
        %v1438 = vld [vmem:[#allocation10 + $0x48] sm:$0xff]
        %v1439 = vld [vmem:[#allocation10 + $0x50] sm:$0xff]
        %v1440 = vld [vmem:[#allocation10 + $0x58] sm:$0xff]
        %v1441 = vld [vmem:[#allocation10 + $0x60] sm:$0xff]
        %v1442 = vld [vmem:[#allocation10 + $0x68] sm:$0xff]
        %v1443 = vld [vmem:[#allocation10 + $0x70] sm:$0xff]
        %v1444 = vld [vmem:[#allocation10 + $0x78] sm:$0xff]
        %v1445 = vld [vmem:[%s9] sm:$0x1]
        %v1447 = vlaneseq
        %v1448 = vshrl.u32 %v1447, 7
        %v1449 = vsub.s32 0, %v1448
        %v1450 = vrot.slane %v1445, %v1449
        %vm1460 = vcmask 1041409
        %v1461 = vsel %vm1460, %v1392, %v1386
        %vm1462 = vcmask 1042434
        %v1463 = vsel %vm1462, %v1398, %v1461
        %vm1464 = vcmask 1043459
        %v1465 = vsel %vm1464, %v1404, %v1463
        %vm1466 = vcmask 1044484
        %v1467 = vsel %vm1466, %v1410, %v1465
        %vm1468 = vcmask 1045509
        %v1469 = vsel %vm1468, %v1416, %v1467
        %vm1470 = vcmask 1046534
        %v1471 = vsel %vm1470, %v1422, %v1469
        %vm1472 = vcmask 1047559
        %v1473 = vsel %vm1472, %v1428, %v1471
        %1475 = vmatprep.subr.mxu0 0.0
        %1476 = vmatpush1.msra.mxu0 %v1429
        %1477 = vmatprep.subr.mxu0 0.0
        %1478 = vmatpush1.msra.mxu0 %v1430
        %1479 = vmatprep.subr.mxu0 0.0
        %1480 = vmatpush1.msra.mxu0 %v1431
        %1481 = vmatprep.subr.mxu0 0.0
        %1482 = vmatpush1.msra.mxu0 %v1432
        %1483 = vmatprep.subr.mxu0 0.0
        %1484 = vmatpush1.msra.mxu0 %v1433
        %1485 = vmatprep.subr.mxu0 0.0
        %1486 = vmatpush1.msra.mxu0 %v1434
        %1487 = vmatprep.subr.mxu0 0.0
        %1488 = vmatpush1.msra.mxu0 %v1435
        %1489 = vmatprep.subr.mxu0 0.0
        %1490 = vmatpush1.msra.mxu0 %v1436
        %1491 = vmatprep.subr.mxu0 0.0
        %1492 = vmatpush1.msra.mxu0 %v1437
        %1493 = vmatprep.subr.mxu0 0.0
        %1494 = vmatpush1.msra.mxu0 %v1438
        %1495 = vmatprep.subr.mxu0 0.0
        %1496 = vmatpush1.msra.mxu0 %v1439
        %1497 = vmatprep.subr.mxu0 0.0
        %1498 = vmatpush1.msra.mxu0 %v1440
        %1499 = vmatprep.subr.mxu0 0.0
        %1500 = vmatpush1.msra.mxu0 %v1441
        %1501 = vmatprep.subr.mxu0 0.0
        %1502 = vmatpush1.msra.mxu0 %v1442
        %1503 = vmatprep.subr.mxu0 0.0
        %1504 = vmatpush1.msra.mxu0 %v1443
        %1505 = vmatprep.subr.mxu0 0.0
        %1506 = vmatpush1.msra.mxu0 %v1444
        %1507 = vmatprep.subr.mxu0 0.0
        %1508 = vmatpush1.msra.mxu0 0.0
        %1509 = vmatprep.subr.mxu0 0.0
        %1510 = vmatpush1.msra.mxu0 0.0
        %1511 = vmatprep.subr.mxu0 0.0
        %1512 = vmatpush1.msra.mxu0 0.0
        %1513 = vmatprep.subr.mxu0 0.0
        %1514 = vmatpush1.msra.mxu0 0.0
        %1515 = vmatprep.subr.mxu0 0.0
        %1516 = vmatpush1.msra.mxu0 0.0
        %1517 = vmatprep.subr.mxu0 0.0
        %1518 = vmatpush1.msra.mxu0 0.0
        %1519 = vmatprep.subr.mxu0 0.0
        %1520 = vmatpush1.msra.mxu0 0.0
        %1521 = vmatprep.subr.mxu0 0.0
        %1522 = vmatpush1.msra.mxu0 0.0
        %1523 = vmatprep.subr.mxu0 0.0
        %1524 = vmatpush1.msra.mxu0 0.0
        %1525 = vmatprep.subr.mxu0 0.0
        %1526 = vmatpush1.msra.mxu0 0.0
        %1527 = vmatprep.subr.mxu0 0.0
        %1528 = vmatpush1.msra.mxu0 0.0
        %1529 = vmatprep.subr.mxu0 0.0
        %1530 = vmatpush1.msra.mxu0 0.0
        %1531 = vmatprep.subr.mxu0 0.0
        %1532 = vmatpush1.msra.mxu0 0.0
        %1533 = vmatprep.subr.mxu0 0.0
        %1534 = vmatpush1.msra.mxu0 0.0
        %1535 = vmatprep.subr.mxu0 0.0
        %1536 = vmatpush1.msra.mxu0 0.0
        %1537 = vmatprep.subr.mxu0 0.0
        %1538 = vmatpush1.msra.mxu0 0.0
        %1539 = vmatprep.mubr.f32.mxu0 0.0
        %1540 = vmatmul.mubr.f32.gmra.mrb[0].mxu0 %v1473
        %v1541 = vpop.f32.mrb[0].mxu0
        %v1542 = vadd.f32 %v1450, %v1541
        %v1543 = vpop.f32.mrb[0].mxu0
        %1544 = vdwg.mxu0
        %1545 = vst [vmem:[%s502] sm:$0xff] %v1542
        %s1546 = sand.u32 %s301, 1
        %s1547 = scalar_lea.sflag [#allocation4], %s1546
        %s1548 = sand.u32 %s301, 1
        %s1549 = smul.addr %s1548, 8
        %s1550 = scalar_lea.vmem [#allocation11], %s1549
        // Predicated region
        $region89: #{tpu_custom_call.1} parent=67 // pred_check
          %p1551 = pneg %p311
        $region90: #{tpu_custom_call.1} parent=67 // pred_check_branch
          %1553 = sbr.rel (%p1551) target = $region92
        $region91: #{tpu_custom_call.1} parent=67 // pred_region
          %s1555 = ssub.s32 128, 128
          %1556 = vsyncadd %s1547, %s1555
          %s1557 = smul.addr %s31, 128
          %s1558 = scalar_lea.hbm %s12, %s1557
          %s1560 = sshll.u32 %s1550, 4
          %s1561 = int_to_ptr.vmem [resolvable:$true] %s1560
          %1563 = dma.vmem_to_hbm [thread:$0]  %s1561, 128, %s1558, %s1547
        $region92: #{tpu_custom_call.1} parent=67 // pred_fallthru
          _
      $region68: #{tpu_custom_call.1} parent=5 // pred_fallthru
        _
      %p1564 = scmp.le.s32.totalorder 2, %s26
      // Predicated region
      $region93: #{tpu_custom_call.1} parent=5 // pred_check
        %p1565 = pneg %p1564
      $region94: #{tpu_custom_call.1} parent=5 // pred_check_branch
        %1567 = sbr.rel (%p1565) target = $region96
      $region95: #{tpu_custom_call.1} parent=5 // pred_region
        %s1568 = ssub.s32 %s26, 2
        // Predicated region
        $region97: #{tpu_custom_call.1} parent=95 // pred_check
          %p1569 = pneg %p317
        $region98: #{tpu_custom_call.1} parent=95 // pred_check_branch
          %1571 = sbr.rel (%p1569) target = $region100
        $region99: #{tpu_custom_call.1} parent=95 // pred_region
          %s1572 = sand.u32 %s302, 1
          %s1573 = scalar_lea.sflag [#allocation4], %s1572
          %s1574 = sand.u32 %s302, 1
          %s1575 = smul.addr %s1574, 8
          %s1576 = scalar_lea.vmem [#allocation11], %s1575
          %1577 = dma.done %s1573, 128
        $region100: #{tpu_custom_call.1} parent=95 // pred_fallthru
          _
      $region96: #{tpu_custom_call.1} parent=5 // pred_fallthru
        _
    $region6: #{tpu_custom_call.1} parent=1 // loop_footer
      %s30 = sadd.s32 1, %s26
    $region7: #{tpu_custom_call.1} parent=1 // loop_footer_branch
      %25 = sbr.rel target = $region3
    $region8: #{tpu_custom_call.1} parent=1 // loop_exit
      _
    %1578 = vsyncpa [#allocation3], 1
    %s1579 = scalar_lea.sflag [#allocation3], 1
    %1580 = vsyncpa %s1579, 1
    %1581 = vsyncpa [#allocation6], 1
    %1582 = vsyncpa [#allocation9], 1
    %1583 = vsyncpa [#allocation4], 1
    %s1584 = scalar_lea.sflag [#allocation4], 1
    %1585 = vsyncpa %s1584, 1

</llo_original>
